<compile_context>
chip_gen: v7x
topology: tpu7x:2x2x1
jax: 0.10.0
libtpu: 0.0.40
codegen_flags: <defaults>
</compile_context>

<pallas_src>
import functools
import re

import jax
import jax.numpy as jnp
from jax.experimental import pallas as pl
from jax.experimental.pallas import tpu as pltpu

EPS = 1e-5          # InstanceNorm2d default eps
NEG_SLOPE = 0.2     # LeakyReLU slope


def _round_up(x, m):
    return ((x + m - 1) // m) * m


def _tpu_generation():
    try:
        kind = jax.devices()[0].device_kind.lower()
    except Exception:
        return 7
    m = re.search(r"(\d+)", kind)
    return int(m.group(1)) if m else 7   # unknown -> most restrictive VMEM


def _valid_mask(shape, row_offset, p2, ow):
    """f32 mask over `shape`: 1.0 where the global flattened row
    (row_offset + i) is a real output position, 0.0 at wrap/padding rows.
    col = row % (ow+1) is computed with an exact float floor (avoids vector
    integer div/rem)."""
    L = ow + 1
    r = jax.lax.broadcasted_iota(jnp.int32, shape, 0) + row_offset
    rf = r.astype(jnp.float32)
    q = jnp.floor((rf + 0.5) * (1.0 / L))
    col = rf - q * float(L)
    valid = jnp.logical_and(col < float(ow) - 0.5, rf < float(p2) - 0.5)
    return valid.astype(jnp.float32)


def _fused_kernel(y_ref, w_ref, o_ref, acc_ref, *, tap_offsets, p2, ow, inv_count):
    """Resident path: conv + InstanceNorm + LeakyReLU for one image / Cout tile."""
    # ---- Convolution: 4 taps = 4 contiguous row windows, MXU-accumulated. ---
    for t, off in enumerate(tap_offsets):
        tap = y_ref[pl.ds(off, p2), :]                                  # bf16
        part = jnp.dot(tap, w_ref[t], preferred_element_type=jnp.float32)
        if t == 0:
            acc_ref[...] = part
        else:
            acc_ref[...] += part
    conv = acc_ref[...]                                                 # (P2, TC) f32

    # ---- InstanceNorm2d stats, single masked pass (E[x^2] - mean^2). --------
    # NOTE: single-pass variance can lose precision if |mean| >> std; guarded
    # with max(.,0) and acceptable at the bf16 matmul tolerance used here.
    mask = _valid_mask(conv.shape, 0, p2, ow)
    masked = conv * mask
    s = jnp.sum(masked, axis=0, keepdims=True)                          # (1, TC)
    ss = jnp.sum(masked * masked, axis=0, keepdims=True)
    mean = s * inv_count
    var = jnp.maximum(ss * inv_count - mean * mean, 0.0)
    scale = jax.lax.rsqrt(var + EPS)                                    # EUP

    # ---- Fused normalize + LeakyReLU(0.2) on store (bf16 output). -----------
    y = (conv - mean) * scale
    o_ref[...] = jnp.where(y >= 0.0, y, NEG_SLOPE * y).astype(o_ref.dtype)


def _conv_stats_kernel(y_ref, w_ref, conv_ref, ssum_ref, ssq_ref, acc_ref,
                       *, tap_offsets, tr, p2, ow):
    """Tiled pass 1: conv tile (bf16) + streamed per-channel sum / sum-of-squares."""
    pt = pl.program_id(2)
    for t, off in enumerate(tap_offsets):
        tap = y_ref[pl.ds(off, tr), :]                                  # bf16
        part = jnp.dot(tap, w_ref[t], preferred_element_type=jnp.float32)
        if t == 0:
            acc_ref[...] = part
        else:
            acc_ref[...] += part
    conv = acc_ref[...]                                                 # (TR, TC) f32

    mask = _valid_mask(conv.shape, pt * tr, p2, ow)
    masked = conv * mask

    @pl.when(pt == 0)
    def _():
        ssum_ref[...] = jnp.zeros_like(ssum_ref)
        ssq_ref[...] = jnp.zeros_like(ssq_ref)

    ssum_ref[...] += jnp.sum(masked, axis=0, keepdims=True)
    ssq_ref[...] += jnp.sum(masked * masked, axis=0, keepdims=True)
    conv_ref[...] = conv.astype(conv_ref.dtype)


def _norm_kernel(ssum_ref, ssq_ref, conv_ref, o_ref, *, inv_count):
    """Tiled pass 2: normalize + LeakyReLU over a conv tile."""
    mean = ssum_ref[...] * inv_count                                    # (1, TC)
    var = jnp.maximum(ssq_ref[...] * inv_count - mean * mean, 0.0)
    scale = jax.lax.rsqrt(var + EPS)
    x = conv_ref[...].astype(jnp.float32)                               # (TR, TC)
    y = (x - mean) * scale
    o_ref[...] = jnp.where(y >= 0.0, y, NEG_SLOPE * y).astype(o_ref.dtype)


def unet_down(x_nchw, weight_oihw, *, force_tiled=False, tile_rows=None):
    """x_nchw: (N, Cin, H, W); weight_oihw: (Cout, Cin, 4, 4). Returns NCHW."""
    n, cin, h, w = x_nchw.shape
    cout = weight_oihw.shape[0]
    assert weight_oihw.shape == (cout, cin, 4, 4)
    assert h % 2 == 0 and w % 2 == 0
    oh, ow = h // 2, w // 2
    p2 = oh * (ow + 1)                         # conv rows incl. wrap column
    c4 = 4 * cin
    c4p = _round_up(c4, 128)
    coutp = _round_up(cout, 128)
    inv_count = 1.0 / float(oh * ow)
    tap_offsets = tuple(di * (ow + 1) + dj for di in (0, 1) for dj in (0, 1))
    real_rows = (oh + 1) * (ow + 1)
    p2_full = _round_up(real_rows + 1, 16)

    gen = _tpu_generation()
    vmem_limit = (48 << 20) if gen >= 7 else (96 << 20)
    budget = int(0.7 * vmem_limit)

    # ---- Space-to-depth (factor 2) of the zero-padded input, in bf16. -------
    xb = x_nchw.astype(jnp.bfloat16)
    x_nhwc = jnp.transpose(xb, (0, 2, 3, 1))
    xp = jnp.pad(x_nhwc, ((0, 0), (1, 1), (1, 1), (0, 0)))   # (N, H+2, W+2, Cin)
    y = xp.reshape(n, oh + 1, 2, ow + 1, 2, cin)
    y = jnp.transpose(y, (0, 1, 3, 2, 4, 5)).reshape(n, real_rows, c4)

    # ---- Weights: 4x4/stride-2 conv == 2x2/stride-1 conv over s2d input. ----
    w_t = jnp.transpose(weight_oihw, (2, 3, 1, 0))           # (KH, KW, Cin, Cout)
    w_t = w_t.reshape(2, 2, 2, 2, cin, cout)                 # (di, a, dj, b, c, o)
    w_t = jnp.transpose(w_t, (0, 2, 1, 3, 4, 5))             # (di, dj, a, b, c, o)
    w2 = w_t.reshape(4, c4, cout)
    w2 = jnp.pad(w2, ((0, 0), (0, c4p - c4), (0, coutp - cout))).astype(jnp.bfloat16)

    # ---- Path / tile-size choice (generation-aware VMEM budget). ------------
    def resident_bytes(tc):
        return (2 * p2_full * c4p * 2        # s2d input, double-buffered bf16
                + 2 * 4 * c4p * tc * 2       # weights
                + 2 * p2 * tc * 2            # bf16 output
                + p2 * tc * 4                # fp32 accumulator scratch
                + 3 * p2 * tc * 4)           # fp32 elementwise temporaries

    tc_out = 128
    use_tiled = bool(force_tiled)
    if not force_tiled:
        if gen >= 6 and coutp % 256 == 0 and resident_bytes(256) <= budget:
            tc_out = 256
        elif resident_bytes(128) > budget:
            use_tiled = True
    n_ct = coutp // tc_out

    # Grid order: keep weights resident across the batch for deep layers,
    # keep per-image activations streaming once for early layers.
    w_bytes = 4 * c4p * coutp * 2
    in_bytes = real_rows * c4p * 2
    order_b = (n - 1) * w_bytes > n * (n_ct - 1) * in_bytes   # Cout-tile outer

    if not use_tiled:
        # =================== Resident (fused single-kernel) path =============
        yf = jnp.pad(y, ((0, 0), (0, p2_full - real_rows), (0, c4p - c4)))

        if order_b:
            grid = (n_ct, n)

            def c2(ct, b):
                return b, ct
        else:
            grid = (n, n_ct)

            def c2(b, ct):
                return b, ct

        if order_b:
            in_reads = n * n_ct * p2_full * c4p * 2 + n_ct * 4 * c4p * tc_out * 2
        else:
            in_reads = n * p2_full * c4p * 2 + n * n_ct * 4 * c4p * tc_out * 2
        bytes_accessed = in_reads + n * p2 * coutp * 2
        flops = 2 * 4 * n * p2 * c4p * coutp

        kernel = functools.partial(_fused_kernel, tap_offsets=tap_offsets,
                                   p2=p2, ow=ow, inv_count=inv_count)
        out = pl.pallas_call(
            kernel,
            out_shape=jax.ShapeDtypeStruct((n, p2, coutp), jnp.bfloat16),
            grid_spec=pltpu.PrefetchScalarGridSpec(
                num_scalar_prefetch=0,
                grid=grid,
                in_specs=[
                    pl.BlockSpec((None, p2_full, c4p),
                                 lambda g0, g1: (c2(g0, g1)[0], 0, 0)),
                    pl.BlockSpec((4, c4p, tc_out),
                                 lambda g0, g1: (0, 0, c2(g0, g1)[1])),
                ],
                out_specs=pl.BlockSpec(
                    (None, p2, tc_out),
                    lambda g0, g1: (c2(g0, g1)[0], 0, c2(g0, g1)[1])),
                scratch_shapes=[pltpu.VMEM((p2, tc_out), jnp.float32)],
            ),
            compiler_params=pltpu.CompilerParams(
                dimension_semantics=("parallel", "parallel"),
                vmem_limit_bytes=vmem_limit,
            ),
            cost_estimate=pl.CostEstimate(
                flops=int(flops), transcendentals=int(n * coutp),
                bytes_accessed=int(bytes_accessed)),
        )(yf, w2)
    else:
        # =================== Tiled (streamed statistics) path ================
        def tiled_bytes(tr_):
            s_ = _round_up(tr_ + ow + 2, 16)
            return (2 * s_ * c4p * 2 + 2 * 4 * c4p * tc_out * 2
                    + 2 * tr_ * tc_out * 2 + tr_ * tc_out * 4
                    + 3 * tr_ * tc_out * 4)

        if tile_rows is None:
            tr = _round_up(min(p2, 4096), 16)
            while tr > 16 and tiled_bytes(tr) > budget:
                tr = max(16, _round_up(tr // 2, 16))
        else:
            tr = _round_up(int(tile_rows), 16)
        n_pt = -(-p2 // tr)
        p2r = n_pt * tr
        s_rows = _round_up(tr + ow + 2, 16)
        total_rows = (n_pt - 1) * tr + s_rows

        yf = jnp.pad(y, ((0, 0), (0, total_rows - real_rows), (0, c4p - c4)))
        # Halo-duplicated row-tile slabs so every tile's taps are in-bounds,
        # contiguous windows (duplication is only the ~(ow+2)-row halo).
        slabs = jnp.stack(
            [yf[:, k * tr:k * tr + s_rows, :] for k in range(n_pt)], axis=1)

        if order_b:
            grid1 = (n_ct, n, n_pt)

            def c3(ct, b, pt):
                return b, ct, pt
        else:
            grid1 = (n, n_ct, n_pt)

            def c3(b, ct, pt):
                return b, ct, pt

        k1 = functools.partial(_conv_stats_kernel, tap_offsets=tap_offsets,
                               tr=tr, p2=p2, ow=ow)
        conv, ssum, ssq = pl.pallas_call(
            k1,
            out_shape=(jax.ShapeDtypeStruct((n, p2r, coutp), jnp.bfloat16),
                       jax.ShapeDtypeStruct((n, 1, coutp), jnp.float32),
                       jax.ShapeDtypeStruct((n, 1, coutp), jnp.float32)),
            grid_spec=pltpu.PrefetchScalarGridSpec(
                num_scalar_prefetch=0,
                grid=grid1,
                in_specs=[
                    pl.BlockSpec(
                        (None, None, s_rows, c4p),
                        lambda g0, g1, g2: (c3(g0, g1, g2)[0],
                                            c3(g0, g1, g2)[2], 0, 0)),
                    pl.BlockSpec(
                        (4, c4p, tc_out),
                        lambda g0, g1, g2: (0, 0, c3(g0, g1, g2)[1])),
                ],
                out_specs=(
                    pl.BlockSpec(
                        (None, tr, tc_out),
                        lambda g0, g1, g2: (c3(g0, g1, g2)[0],
                                            c3(g0, g1, g2)[2],
                                            c3(g0, g1, g2)[1])),
                    pl.BlockSpec(
                        (None, 1, tc_out),
                        lambda g0, g1, g2: (c3(g0, g1, g2)[0], 0,
                                            c3(g0, g1, g2)[1])),
                    pl.BlockSpec(
                        (None, 1, tc_out),
                        lambda g0, g1, g2: (c3(g0, g1, g2)[0], 0,
                                            c3(g0, g1, g2)[1])),
                ),
                scratch_shapes=[pltpu.VMEM((tr, tc_out), jnp.float32)],
            ),
            compiler_params=pltpu.CompilerParams(
                dimension_semantics=("parallel", "parallel", "arbitrary"),
                vmem_limit_bytes=vmem_limit,
            ),
        )(slabs, w2)

        k2 = functools.partial(_norm_kernel, inv_count=inv_count)
        out = pl.pallas_call(
            k2,
            out_shape=jax.ShapeDtypeStruct((n, p2r, coutp), jnp.bfloat16),
            grid_spec=pltpu.PrefetchScalarGridSpec(
                num_scalar_prefetch=0,
                grid=(n, n_ct, n_pt),
                in_specs=[
                    pl.BlockSpec((None, 1, tc_out), lambda b, ct, pt: (b, 0, ct)),
                    pl.BlockSpec((None, 1, tc_out), lambda b, ct, pt: (b, 0, ct)),
                    pl.BlockSpec((None, tr, tc_out), lambda b, ct, pt: (b, pt, ct)),
                ],
                out_specs=pl.BlockSpec((None, tr, tc_out),
                                       lambda b, ct, pt: (b, pt, ct)),
            ),
            compiler_params=pltpu.CompilerParams(
                dimension_semantics=("parallel", "parallel", "parallel"),
                vmem_limit_bytes=vmem_limit,
            ),
        )(ssum, ssq, conv)

    # Drop padded rows / wrap column / channel padding, back to NCHW.
    out = out[:, :p2, :cout].reshape(n, oh, ow + 1, cout)[:, :, :ow, :]
    return jnp.transpose(out, (0, 3, 1, 2)).astype(x_nchw.dtype)


def _reference(x, w):
    """Pure-JAX reference of the PyTorch UNetDown forward (fp32)."""
    conv = jax.lax.conv_general_dilated(
        x, w, window_strides=(2, 2), padding=((1, 1), (1, 1)),
        dimension_numbers=("NCHW", "OIHW", "NCHW"),
        precision=jax.lax.Precision.HIGHEST)
    mean = conv.mean(axis=(2, 3), keepdims=True)
    var = conv.var(axis=(2, 3), keepdims=True)             # biased, as in torch
    normed = (conv - mean) * jax.lax.rsqrt(var + EPS)
    return jnp.where(normed >= 0, normed, NEG_SLOPE * normed)


if __name__ == "__main__":
    key = jax.random.PRNGKey(0)
    k_x, k_w = jax.random.split(key)

    N, Cin, H, W = 2, 4, 16, 16
    Cout = 32

    x = jax.random.normal(k_x, (N, Cin, H, W), dtype=jnp.float32)
    weight = jax.random.normal(k_w, (Cout, Cin, 4, 4), dtype=jnp.float32) * 0.1

    ref = _reference(x, weight)

    # 1) Resident fused path (Cout-tile-outer grid order for this shape).
    fn = jax.jit(unet_down)
    y1 = fn(x, weight)
    jax.block_until_ready(y1)
    assert y1.shape == (N, Cout, H // 2, W // 2)
    err1 = float(jnp.max(jnp.abs(y1 - ref)))
    assert err1 < 0.2, f"resident path max abs err {err1}"

    # 2) Resident fused path, batch-outer grid order (n == 1).
    y2 = fn(x[:1], weight)
    jax.block_until_ready(y2)
    err2 = float(jnp.max(jnp.abs(y2 - ref[:1])))
    assert err2 < 0.2, f"resident (batch-outer) max abs err {err2}"

    # 3) Tiled streamed-statistics path, forced with a small tile so the
    #    cross-tile sum/sum-of-squares accumulation is exercised.
    tiled_fn = jax.jit(functools.partial(unet_down, force_tiled=True, tile_rows=32))
    y3 = tiled_fn(x, weight)
    jax.block_until_ready(y3)
    err3 = float(jnp.max(jnp.abs(y3 - ref)))
    assert err3 < 0.2, f"tiled path max abs err {err3}"

    print("KERNEL_OK")
</pallas_src>

<mosaic_0001>
module attributes {stable_mosaic.version = 11 : i64} {
  func.func @_fused_kernel(%arg0: i32, %arg1: i32, %arg2: memref<1x96x128xbf16, #tpu.memory_space<vmem>>, %arg3: memref<4x128x128xbf16, #tpu.memory_space<vmem>>, %arg4: memref<1x72x128xbf16, #tpu.memory_space<vmem>>, %arg5: memref<72x128xf32, #tpu.memory_space<vmem>>) attributes {dimension_semantics = [#tpu.dimension_semantics<parallel>, #tpu.dimension_semantics<parallel>], iteration_bounds = array<i64: 1, 2>, scalar_prefetch = 0 : i64, scratch_operands = 1 : i64, tpu.core_type = #tpu.core_type<tc>, window_params = [{transform_indices = @transform_0, window_bounds = array<i64: 1, 96, 128>}, {transform_indices = @transform_1, window_bounds = array<i64: 4, 128, 128>}, {transform_indices = @transform_2, window_bounds = array<i64: 1, 72, 128>}]} {
    %c0 = arith.constant 0 : index
    %c0_0 = arith.constant 0 : index
    %c0_1 = arith.constant 0 : index
    %0 = vector.load %arg2[%c0, %c0_0, %c0_1] : memref<1x96x128xbf16, #tpu.memory_space<vmem>>, vector<1x72x128xbf16>
    %1 = vector.shape_cast %0 : vector<1x72x128xbf16> to vector<72x128xbf16>
    %c0_2 = arith.constant 0 : index
    %c0_3 = arith.constant 0 : index
    %c0_4 = arith.constant 0 : index
    %2 = vector.load %arg3[%c0_2, %c0_3, %c0_4] : memref<4x128x128xbf16, #tpu.memory_space<vmem>>, vector<1x128x128xbf16>
    %3 = vector.shape_cast %2 : vector<1x128x128xbf16> to vector<128x128xbf16>
    %cst = arith.constant dense<0.000000e+00> : vector<72x128xf32>
    %4 = tpu.matmul %1, %3, %cst {dimension_numbers = #tpu.dot_dimension_numbers<[1], [0], [0], [1], [0, 0, 1, 1], [], []>} : vector<72x128xbf16>, vector<128x128xbf16>, vector<72x128xf32> -> vector<72x128xf32>
    %c0_5 = arith.constant 0 : index
    %c0_6 = arith.constant 0 : index
    %5 = vector.load %arg5[%c0_5, %c0_6] : memref<72x128xf32, #tpu.memory_space<vmem>>, vector<72x128xf32>
    tpu.vector_store %arg5[%c0_5, %c0_6], %4 {strides = array<i32>} : memref<72x128xf32, #tpu.memory_space<vmem>>, vector<72x128xf32>,
    %c0_7 = arith.constant 0 : index
    %c1 = arith.constant 1 : index
    %c0_8 = arith.constant 0 : index
    %6 = vector.load %arg2[%c0_7, %c1, %c0_8] : memref<1x96x128xbf16, #tpu.memory_space<vmem>>, vector<1x72x128xbf16>
    %7 = vector.shape_cast %6 : vector<1x72x128xbf16> to vector<72x128xbf16>
    %c1_9 = arith.constant 1 : index
    %c0_10 = arith.constant 0 : index
    %c0_11 = arith.constant 0 : index
    %8 = vector.load %arg3[%c1_9, %c0_10, %c0_11] : memref<4x128x128xbf16, #tpu.memory_space<vmem>>, vector<1x128x128xbf16>
    %9 = vector.shape_cast %8 : vector<1x128x128xbf16> to vector<128x128xbf16>
    %cst_12 = arith.constant dense<0.000000e+00> : vector<72x128xf32>
    %10 = tpu.matmul %7, %9, %cst_12 {dimension_numbers = #tpu.dot_dimension_numbers<[1], [0], [0], [1], [0, 0, 1, 1], [], []>} : vector<72x128xbf16>, vector<128x128xbf16>, vector<72x128xf32> -> vector<72x128xf32>
    %c0_13 = arith.constant 0 : index
    %c0_14 = arith.constant 0 : index
    %11 = vector.load %arg5[%c0_13, %c0_14] : memref<72x128xf32, #tpu.memory_space<vmem>>, vector<72x128xf32>
    %12 = arith.addf %11, %10 : vector<72x128xf32>
    %c0_15 = arith.constant 0 : index
    %c0_16 = arith.constant 0 : index
    %13 = vector.load %arg5[%c0_15, %c0_16] : memref<72x128xf32, #tpu.memory_space<vmem>>, vector<72x128xf32>
    tpu.vector_store %arg5[%c0_15, %c0_16], %12 {strides = array<i32>} : memref<72x128xf32, #tpu.memory_space<vmem>>, vector<72x128xf32>,
    %c0_17 = arith.constant 0 : index
    %c9 = arith.constant 9 : index
    %c0_18 = arith.constant 0 : index
    %14 = vector.load %arg2[%c0_17, %c9, %c0_18] : memref<1x96x128xbf16, #tpu.memory_space<vmem>>, vector<1x72x128xbf16>
    %15 = vector.shape_cast %14 : vector<1x72x128xbf16> to vector<72x128xbf16>
    %c2 = arith.constant 2 : index
    %c0_19 = arith.constant 0 : index
    %c0_20 = arith.constant 0 : index
    %16 = vector.load %arg3[%c2, %c0_19, %c0_20] : memref<4x128x128xbf16, #tpu.memory_space<vmem>>, vector<1x128x128xbf16>
    %17 = vector.shape_cast %16 : vector<1x128x128xbf16> to vector<128x128xbf16>
    %cst_21 = arith.constant dense<0.000000e+00> : vector<72x128xf32>
    %18 = tpu.matmul %15, %17, %cst_21 {dimension_numbers = #tpu.dot_dimension_numbers<[1], [0], [0], [1], [0, 0, 1, 1], [], []>} : vector<72x128xbf16>, vector<128x128xbf16>, vector<72x128xf32> -> vector<72x128xf32>
    %c0_22 = arith.constant 0 : index
    %c0_23 = arith.constant 0 : index
    %19 = vector.load %arg5[%c0_22, %c0_23] : memref<72x128xf32, #tpu.memory_space<vmem>>, vector<72x128xf32>
    %20 = arith.addf %19, %18 : vector<72x128xf32>
    %c0_24 = arith.constant 0 : index
    %c0_25 = arith.constant 0 : index
    %21 = vector.load %arg5[%c0_24, %c0_25] : memref<72x128xf32, #tpu.memory_space<vmem>>, vector<72x128xf32>
    tpu.vector_store %arg5[%c0_24, %c0_25], %20 {strides = array<i32>} : memref<72x128xf32, #tpu.memory_space<vmem>>, vector<72x128xf32>,
    %c0_26 = arith.constant 0 : index
    %c10 = arith.constant 10 : index
    %c0_27 = arith.constant 0 : index
    %22 = vector.load %arg2[%c0_26, %c10, %c0_27] : memref<1x96x128xbf16, #tpu.memory_space<vmem>>, vector<1x72x128xbf16>
    %23 = vector.shape_cast %22 : vector<1x72x128xbf16> to vector<72x128xbf16>
    %c3 = arith.constant 3 : index
    %c0_28 = arith.constant 0 : index
    %c0_29 = arith.constant 0 : index
    %24 = vector.load %arg3[%c3, %c0_28, %c0_29] : memref<4x128x128xbf16, #tpu.memory_space<vmem>>, vector<1x128x128xbf16>
    %25 = vector.shape_cast %24 : vector<1x128x128xbf16> to vector<128x128xbf16>
    %cst_30 = arith.constant dense<0.000000e+00> : vector<72x128xf32>
    %26 = tpu.matmul %23, %25, %cst_30 {dimension_numbers = #tpu.dot_dimension_numbers<[1], [0], [0], [1], [0, 0, 1, 1], [], []>} : vector<72x128xbf16>, vector<128x128xbf16>, vector<72x128xf32> -> vector<72x128xf32>
    %c0_31 = arith.constant 0 : index
    %c0_32 = arith.constant 0 : index
    %27 = vector.load %arg5[%c0_31, %c0_32] : memref<72x128xf32, #tpu.memory_space<vmem>>, vector<72x128xf32>
    %28 = arith.addf %27, %26 : vector<72x128xf32>
    %c0_33 = arith.constant 0 : index
    %c0_34 = arith.constant 0 : index
    %29 = vector.load %arg5[%c0_33, %c0_34] : memref<72x128xf32, #tpu.memory_space<vmem>>, vector<72x128xf32>
    tpu.vector_store %arg5[%c0_33, %c0_34], %28 {strides = array<i32>} : memref<72x128xf32, #tpu.memory_space<vmem>>, vector<72x128xf32>,
    %c0_35 = arith.constant 0 : index
    %c0_36 = arith.constant 0 : index
    %30 = vector.load %arg5[%c0_35, %c0_36] : memref<72x128xf32, #tpu.memory_space<vmem>>, vector<72x128xf32>
    %31 = tpu.iota {dimensions = array<i32: 0>} : vector<72x128xi32>
    %c0_i32 = arith.constant 0 : i32
    %32 = vector.broadcast %c0_i32 : i32 to vector<72x128xi32>
    %33 = arith.addi %31, %32 : vector<72x128xi32>
    %34 = arith.sitofp %33 : vector<72x128xi32> to vector<72x128xf32>
    %cst_37 = arith.constant 5.000000e-01 : f32
    %35 = vector.broadcast %cst_37 : f32 to vector<72x128xf32>
    %36 = arith.addf %34, %35 : vector<72x128xf32>
    %cst_38 = arith.constant 0.111111112 : f32
    %37 = vector.broadcast %cst_38 : f32 to vector<72x128xf32>
    %38 = arith.mulf %36, %37 : vector<72x128xf32>
    %39 = math.floor %38 : vector<72x128xf32>
    %cst_39 = arith.constant 9.000000e+00 : f32
    %40 = vector.broadcast %cst_39 : f32 to vector<72x128xf32>
    %41 = arith.mulf %39, %40 : vector<72x128xf32>
    %42 = arith.subf %34, %41 : vector<72x128xf32>
    %cst_40 = arith.constant 7.500000e+00 : f32
    %43 = vector.broadcast %cst_40 : f32 to vector<72x128xf32>
    %44 = arith.cmpf olt, %42, %43 : vector<72x128xf32>
    %cst_41 = arith.constant 7.150000e+01 : f32
    %45 = vector.broadcast %cst_41 : f32 to vector<72x128xf32>
    %46 = arith.cmpf olt, %34, %45 : vector<72x128xf32>
    %47 = arith.andi %44, %46 : vector<72x128xi1>
    %48 = arith.extui %47 : vector<72x128xi1> to vector<72x128xi32>
    %49 = arith.sitofp %48 : vector<72x128xi32> to vector<72x128xf32>
    %50 = arith.mulf %30, %49 : vector<72x128xf32>
    %cst_42 = arith.constant dense<0.000000e+00> : vector<128xf32>
    %51 = vector.multi_reduction <add>, %50, %cst_42 [0] : vector<72x128xf32> to vector<128xf32>
    %52 = vector.shape_cast %51 : vector<128xf32> to vector<1x128xf32>
    %53 = arith.mulf %50, %50 : vector<72x128xf32>
    %cst_43 = arith.constant dense<0.000000e+00> : vector<128xf32>
    %54 = vector.multi_reduction <add>, %53, %cst_43 [0] : vector<72x128xf32> to vector<128xf32>
    %55 = vector.shape_cast %54 : vector<128xf32> to vector<1x128xf32>
    %cst_44 = arith.constant 1.562500e-02 : f32
    %56 = vector.broadcast %cst_44 : f32 to vector<1x128xf32>
    %57 = arith.mulf %52, %56 : vector<1x128xf32>
    %cst_45 = arith.constant 1.562500e-02 : f32
    %58 = vector.broadcast %cst_45 : f32 to vector<1x128xf32>
    %59 = arith.mulf %55, %58 : vector<1x128xf32>
    %60 = arith.mulf %57, %57 : vector<1x128xf32>
    %61 = arith.subf %59, %60 : vector<1x128xf32>
    %cst_46 = arith.constant 0.000000e+00 : f32
    %62 = vector.broadcast %cst_46 : f32 to vector<1x128xf32>
    %63 = arith.maximumf %61, %62 : vector<1x128xf32>
    %cst_47 = arith.constant 9.99999974E-6 : f32
    %64 = vector.broadcast %cst_47 : f32 to vector<1x128xf32>
    %65 = arith.addf %63, %64 : vector<1x128xf32>
    %66 = math.rsqrt %65 : vector<1x128xf32>
    %67 = vector.broadcast %57 : vector<1x128xf32> to vector<72x128xf32>
    %68 = arith.subf %30, %67 : vector<72x128xf32>
    %69 = vector.broadcast %66 : vector<1x128xf32> to vector<72x128xf32>
    %70 = arith.mulf %68, %69 : vector<72x128xf32>
    %cst_48 = arith.constant 0.000000e+00 : f32
    %71 = vector.broadcast %cst_48 : f32 to vector<72x128xf32>
    %72 = arith.cmpf oge, %70, %71 : vector<72x128xf32>
    %cst_49 = arith.constant 2.000000e-01 : f32
    %73 = vector.broadcast %cst_49 : f32 to vector<72x128xf32>
    %74 = arith.mulf %73, %70 : vector<72x128xf32>
    %75 = arith.select %72, %70, %74 : vector<72x128xi1>, vector<72x128xf32>
    %76 = arith.truncf %75 : vector<72x128xf32> to vector<72x128xbf16>
    %c0_50 = arith.constant 0 : index
    %c0_51 = arith.constant 0 : index
    %c0_52 = arith.constant 0 : index
    %77 = vector.load %arg4[%c0_50, %c0_51, %c0_52] : memref<1x72x128xbf16, #tpu.memory_space<vmem>>, vector<1x72x128xbf16>
    %78 = vector.shape_cast %77 : vector<1x72x128xbf16> to vector<72x128xbf16>
    %79 = vector.shape_cast %76 : vector<72x128xbf16> to vector<1x72x128xbf16>
    tpu.vector_store %arg4[%c0_50, %c0_51, %c0_52], %79 {strides = array<i32>} : memref<1x72x128xbf16, #tpu.memory_space<vmem>>, vector<1x72x128xbf16>,
    return
  }
  func.func @transform_0(%arg0: i32, %arg1: i32) -> (i32, i32, i32) {
    %c0_i32 = arith.constant 0 : i32
    %c0_i32_0 = arith.constant 0 : i32
    %c0_i32_1 = arith.constant 0 : i32
    return %arg1, %c0_i32, %c0_i32_0 : i32, i32, i32
  }
  func.func @transform_1(%arg0: i32, %arg1: i32) -> (i32, i32, i32) {
    %c0_i32 = arith.constant 0 : i32
    %c0_i32_0 = arith.constant 0 : i32
    %c0_i32_1 = arith.constant 0 : i32
    return %c0_i32, %c0_i32_0, %arg0 : i32, i32, i32
  }
  func.func @transform_2(%arg0: i32, %arg1: i32) -> (i32, i32, i32) {
    %c0_i32 = arith.constant 0 : i32
    %c0_i32_0 = arith.constant 0 : i32
    return %arg1, %c0_i32, %arg0 : i32, i32, i32
  }
}

</mosaic_0001>

<llo_original>
// kernel: unet_down.1
$region0: #{unet_down.1}
  #allocation0 [shape = 'u32[]', space=smem, size = 0x4, offset = 0x4, fixed_abs, tag = 'smem constant byte address 0x4 - core index']
  #allocation1 [shape = 'u32[144,128]{1,0:T(1,128)}', space=vmem, size = 0x12000, scoped, tag = 'internal scratch']
  #allocation2 [shape = 'f32[72,128]{1,0:T(8,128)}', space=vmem, size = 0x9000, scoped, tag = 'scratch operand']
  %s0 = inlined_call_operand.vmem [shape: bf16[2,96,128], index: 0, kind: input, shape index: {}]
  %s1 = inlined_call_operand.vmem [shape: bf16[4,128,128], index: 1, kind: input, shape index: {}]
  %s2 = inlined_call_operand.vmem [shape: bf16[2,72,128], index: 2, kind: output, shape index: {}]
  %s3 = sld [smem:[#allocation0]]
  $region41: #{unet_down.1} parent=0
    _
  %s5 = ssub.s32 1, %s3
  %s6 = scalar_select 0, %s5, %s3
  loop: start=0, step=1, limit=4
  $region2: #{unet_down.1} parent=0 // loop_pre_header
    _
  $region3: #{unet_down.1} parent=0 // loop_header
    %s8 = sphi 0, %s12
    %p9 = scmp.ge.s32.totalorder %s8, 4
    %s15 = sphi 0, %s27
    %s16 = sphi 0, %s23
    %s17 = sphi 0, %s15
    %s18 = sphi 0, %s16
    %s19 = sphi 0, %s17
    %s20 = sphi 0, %s18
    %s30 = sphi 0, %s32
    %s33 = sphi 0, %s30
    %s34 = sphi 0, %s33
    %s50 = sphi 0, %s34
    %s56 = sphi 0, %s58
    %s59 = sphi 0, %s56
    %s60 = sphi 0, %s59
    %s76 = sphi 0, %s60
    %s84 = sphi 0, %s86
    %s87 = sphi 0, %s84
    %s88 = sphi 0, %s87
    %s104 = sphi 0, %s88
  $region4: #{unet_down.1} parent=0 // loop_header_branch
    %11 = sbr.rel (%p9) target = $region8
  $region5: #{unet_down.1} parent=0 // loop_body
    %s13 = ssub.s32 %s8, 1
    %s14 = ssub.s32 %s8, 2
    %s21 = sadd.s32 1, %s16
    %p22 = scmp.ge.s32.totalorder %s21, 2
    %s23 = scalar_select %p22, 0, %s21
    %s24 = sadd.s32 1, %s15
    %s25 = scalar_select %p22, %s24, %s15
    %p26 = scmp.ge.s32.totalorder %s25, 1
    %s27 = scalar_select %p26, 0, %s25
    %s28 = ssub.s32 %s16, %s23
    %p29 = scmp.eq.s32.totalorder %s28, 0
    %s31 = sadd.s32 %s30, 1
    %s32 = scalar_select %p29, %s30, %s31
    %p35 = pneg %p29
    %p36 = scmp.eq.s32.totalorder %s8, 1
    %p37 = por %p35, %p36
    %p38 = scmp.ne.s32.totalorder %s30, %s33
    %p39 = scmp.eq.s32.totalorder %s8, 0
    %p40 = por %p38, %p39
    %p41 = scmp.ne.s32.totalorder %s30, %s33
    %p42 = scmp.eq.s32.totalorder %s13, 1
    %p43 = por %p41, %p42
    %p44 = scmp.ne.s32.totalorder %s33, %s34
    %p45 = scmp.eq.s32.totalorder %s13, 0
    %p46 = por %p44, %p45
    %p47 = scmp.ne.s32.totalorder %s33, %s34
    %p48 = scmp.eq.s32.totalorder %s14, 1
    %p49 = por %p47, %p48
    %p51 = scmp.ne.s32.totalorder %s34, %s50
    %p52 = scmp.eq.s32.totalorder %s14, 0
    %p53 = por %p51, %p52
    %s54 = ssub.s32 %s15, %s27
    %p55 = scmp.eq.s32.totalorder %s54, 0
    %s57 = sadd.s32 %s56, 1
    %s58 = scalar_select %p55, %s56, %s57
    %p61 = pneg %p55
    %p62 = scmp.eq.s32.totalorder %s8, 1
    %p63 = por %p61, %p62
    %p64 = scmp.ne.s32.totalorder %s56, %s59
    %p65 = scmp.eq.s32.totalorder %s8, 0
    %p66 = por %p64, %p65
    %p67 = scmp.ne.s32.totalorder %s56, %s59
    %p68 = scmp.eq.s32.totalorder %s13, 1
    %p69 = por %p67, %p68
    %p70 = scmp.ne.s32.totalorder %s59, %s60
    %p71 = scmp.eq.s32.totalorder %s13, 0
    %p72 = por %p70, %p71
    %p73 = scmp.ne.s32.totalorder %s59, %s60
    %p74 = scmp.eq.s32.totalorder %s14, 1
    %p75 = por %p73, %p74
    %p77 = scmp.ne.s32.totalorder %s60, %s76
    %p78 = scmp.eq.s32.totalorder %s14, 0
    %p79 = por %p77, %p78
    %s80 = ssub.s32 %s16, %s23
    %s81 = ssub.s32 %s15, %s27
    %s82 = sor.u32 %s80, %s81
    %p83 = scmp.eq.s32.totalorder %s82, 0
    %s85 = sadd.s32 %s84, 1
    %s86 = scalar_select %p83, %s84, %s85
    %p89 = pneg %p83
    %p90 = scmp.eq.s32.totalorder %s8, 1
    %p91 = por %p89, %p90
    %p92 = scmp.ne.s32.totalorder %s84, %s87
    %p93 = scmp.eq.s32.totalorder %s8, 0
    %p94 = por %p92, %p93
    %p95 = scmp.ne.s32.totalorder %s84, %s87
    %p96 = scmp.eq.s32.totalorder %s13, 1
    %p97 = por %p95, %p96
    %p98 = scmp.ne.s32.totalorder %s87, %s88
    %p99 = scmp.eq.s32.totalorder %s13, 0
    %p100 = por %p98, %p99
    %p101 = scmp.ne.s32.totalorder %s87, %s88
    %p102 = scmp.eq.s32.totalorder %s14, 1
    %p103 = por %p101, %p102
    %p105 = scmp.ne.s32.totalorder %s88, %s104
    %p106 = scmp.eq.s32.totalorder %s14, 0
    %p107 = por %p105, %p106
    %p108 = scmp.le.s32.totalorder 1, %s8
    %p109 = scmp.lt.s32.totalorder %s8, 3
    %p110 = pnand %p108, %p109
    %p111 = pneg %p110
    // Predicated region
    $region9: #{unet_down.1} parent=5 // pred_check
      _
    $region10: #{unet_down.1} parent=5 // pred_check_branch
      %113 = sbr.rel (%p110) target = $region12
    $region11: #{unet_down.1} parent=5 // pred_region
      %s114 = ssub.s32 %s8, 1
      // Predicated region
      $region13: #{unet_down.1} parent=11 // pred_check
        %p115 = pneg %p72
      $region14: #{unet_down.1} parent=11 // pred_check_branch
        %117 = sbr.rel (%p115) target = $region16
      $region15: #{unet_down.1} parent=11 // pred_region
        %p118 = scmp.lt.s32.totalorder %s17, 0
        %s119 = scalar_select %p118, %s17, 0
        %s120 = smul.addr %s119, 4
        %s121 = scalar_lea.vmem %s1, %s120
      $region16: #{unet_down.1} parent=11 // pred_fallthru
        _
    $region12: #{unet_down.1} parent=5 // pred_fallthru
      _
    %p122 = scmp.lt.s32.totalorder %s8, 2
    // Predicated region
    $region17: #{unet_down.1} parent=5 // pred_check
      %p123 = pneg %p122
    $region18: #{unet_down.1} parent=5 // pred_check_branch
      %125 = sbr.rel (%p123) target = $region20
    $region19: #{unet_down.1} parent=5 // pred_region
      // Predicated region
      $region21: #{unet_down.1} parent=19 // pred_check
        %p126 = pneg %p40
      $region22: #{unet_down.1} parent=19 // pred_check_branch
        %128 = sbr.rel (%p126) target = $region24
      $region23: #{unet_down.1} parent=19 // pred_region
        %p129 = scmp.lt.s32.totalorder %s16, 1
        %s130 = scalar_select %p129, %s16, 1
        %s131 = smul.addr %s130, 12
        %s132 = smul.addr %s131, 4
        %s133 = scalar_lea.vmem %s0, %s132
      $region24: #{unet_down.1} parent=19 // pred_fallthru
        _
    $region20: #{unet_down.1} parent=5 // pred_fallthru
      _
    %p134 = scmp.le.s32.totalorder 1, %s8
    %p135 = scmp.lt.s32.totalorder %s8, 3
    %p136 = pnand %p134, %p135
    %p137 = pneg %p136
    // Predicated region
    $region25: #{unet_down.1} parent=5 // pred_check
      _
    $region26: #{unet_down.1} parent=5 // pred_check_branch
      %139 = sbr.rel (%p136) target = $region28
    $region27: #{unet_down.1} parent=5 // pred_region
      %s140 = ssub.s32 %s8, 1
      %p141 = scmp.lt.s32.totalorder %s18, 1
      %s142 = scalar_select %p141, %s18, 1
      %s143 = smul.addr %s142, 12
      %s144 = smul.addr %s143, 4
      %s145 = scalar_lea.vmem %s0, %s144
      %p146 = pneg %p46
      %p147 = pneg %p43
      %p148 = scmp.lt.s32.totalorder %s17, 0
      %s149 = scalar_select %p148, %s17, 0
      %s150 = smul.addr %s149, 4
      %s151 = scalar_lea.vmem %s1, %s150
      %p152 = pneg %p72
      %p153 = pneg %p69
      %p154 = pneg %p100
      %p155 = pneg %p97
      %p156 = scmp.lt.s32.totalorder %s18, 1
      %s157 = scalar_select %p156, %s18, 1
      %p158 = scmp.lt.s32.totalorder %s17, 0
      %s159 = scalar_select %p158, %s17, 0
      %s160 = smul.addr %s157, 9
      %s161 = sadd.s32 %s159, %s160
      %s162 = smul.addr %s161, 4
      %s163 = scalar_lea.vmem %s2, %s162
      %p164 = scmp.lt.s32.totalorder %s18, 1
      %s165 = scalar_select %p164, %s18, 1
      %s166 = smul.addr %s165, 12
      %s167 = smul.addr %s166, 4
      %s168 = scalar_lea.vmem %s0, %s167
      %p169 = scmp.lt.s32.totalorder %s17, 0
      %s170 = scalar_select %p169, %s17, 0
      %s171 = smul.addr %s170, 4
      %s172 = scalar_lea.vmem %s1, %s171
      %p173 = scmp.lt.s32.totalorder %s18, 1
      %s174 = scalar_select %p173, %s18, 1
      %p175 = scmp.lt.s32.totalorder %s17, 0
      %s176 = scalar_select %p175, %s17, 0
      %s177 = smul.addr %s174, 9
      %s178 = sadd.s32 %s176, %s177
      %s179 = smul.addr %s178, 4
      %s180 = scalar_lea.vmem %s2, %s179
      %v182 = vld [vmem:[%s168] sm:$0xf]
      %v183 = vld [vmem:[%s168 + $0x4] sm:$0xf]
      %v184 = vld [vmem:[%s168 + $0x8] sm:$0xf]
      %v185 = vld [vmem:[%s168 + $0xc] sm:$0xf]
      %v186 = vld [vmem:[%s168 + $0x10] sm:$0xf]
      %v187 = vld [vmem:[%s168 + $0x14] sm:$0xf]
      %v188 = vld [vmem:[%s168 + $0x18] sm:$0xf]
      %v189 = vld [vmem:[%s168 + $0x1c] sm:$0xf]
      %v190 = vld [vmem:[%s168 + $0x20] sm:$0xf]
      %v191 = vld [vmem:[%s172] sm:$0xf]
      %v192 = vld [vmem:[%s172 + $0x4] sm:$0xf]
      %v193 = vld [vmem:[%s172 + $0x8] sm:$0xf]
      %v194 = vld [vmem:[%s172 + $0xc] sm:$0xf]
      %v195 = vld [vmem:[%s172 + $0x10] sm:$0xf]
      %v196 = vld [vmem:[%s172 + $0x14] sm:$0xf]
      %v197 = vld [vmem:[%s172 + $0x18] sm:$0xf]
      %v198 = vld [vmem:[%s172 + $0x1c] sm:$0xf]
      %v199 = vld [vmem:[%s172 + $0x20] sm:$0xf]
      %v200 = vld [vmem:[%s172 + $0x24] sm:$0xf]
      %v201 = vld [vmem:[%s172 + $0x28] sm:$0xf]
      %v202 = vld [vmem:[%s172 + $0x2c] sm:$0xf]
      %v203 = vld [vmem:[%s172 + $0x30] sm:$0xf]
      %v204 = vld [vmem:[%s172 + $0x34] sm:$0xf]
      %v205 = vld [vmem:[%s172 + $0x38] sm:$0xf]
      %v206 = vld [vmem:[%s172 + $0x3c] sm:$0xf]
      %v216 = vunpack.c.l.b16 %v182
      %v217 = vunpack.c.l.b16 %v183
      %v218 = vunpack.c.l.b16 %v184
      %v219 = vunpack.c.l.b16 %v185
      %v220 = vunpack.c.l.b16 %v186
      %v221 = vunpack.c.l.b16 %v187
      %v222 = vunpack.c.l.b16 %v188
      %v223 = vunpack.c.l.b16 %v189
      %v224 = vunpack.c.l.b16 %v190
      %v225 = vpack.c.b16 %v217, %v216
      %v226 = vpack.c.b16 %v219, %v218
      %v227 = vpack.c.b16 %v221, %v220
      %v228 = vpack.c.b16 %v223, %v222
      %v229 = vpack.c.b16 %v224, %v224
      %v251 = vunpack.c.l.b16 %v191
      %v252 = vunpack.c.l.b16 %v192
      %v253 = vunpack.c.l.b16 %v193
      %v254 = vunpack.c.l.b16 %v194
      %v255 = vunpack.c.l.b16 %v195
      %v256 = vunpack.c.l.b16 %v196
      %v257 = vunpack.c.l.b16 %v197
      %v258 = vunpack.c.l.b16 %v198
      %v259 = vunpack.c.l.b16 %v199
      %v260 = vunpack.c.l.b16 %v200
      %v261 = vunpack.c.l.b16 %v201
      %v262 = vunpack.c.l.b16 %v202
      %v263 = vunpack.c.l.b16 %v203
      %v264 = vunpack.c.l.b16 %v204
      %v265 = vunpack.c.l.b16 %v205
      %v266 = vunpack.c.l.b16 %v206
      %v267 = vpack.c.b16 %v252, %v251
      %v268 = vpack.c.b16 %v254, %v253
      %v269 = vpack.c.b16 %v256, %v255
      %v270 = vpack.c.b16 %v258, %v257
      %v271 = vpack.c.b16 %v260, %v259
      %v272 = vpack.c.b16 %v262, %v261
      %v273 = vpack.c.b16 %v264, %v263
      %v274 = vpack.c.b16 %v266, %v265
      %283 = vmatprep.subr.bf16.mxu0 0
      %284 = vmatpush1.bf16.msra.mxu0 %v267
      %285 = vmatprep.subr.bf16.mxu0 0
      %286 = vmatpush1.bf16.msra.mxu0 %v268
      %287 = vmatprep.subr.bf16.mxu0 0
      %288 = vmatpush1.bf16.msra.mxu0 %v269
      %289 = vmatprep.subr.bf16.mxu0 0
      %290 = vmatpush1.bf16.msra.mxu0 %v270
      %291 = vmatprep.subr.bf16.mxu0 0
      %292 = vmatpush1.bf16.msra.mxu0 %v271
      %293 = vmatprep.subr.bf16.mxu0 0
      %294 = vmatpush1.bf16.msra.mxu0 %v272
      %295 = vmatprep.subr.bf16.mxu0 0
      %296 = vmatpush1.bf16.msra.mxu0 %v273
      %297 = vmatprep.subr.bf16.mxu0 0
      %298 = vmatpush1.bf16.msra.mxu0 %v274
      %299 = vmatprep.subr.bf16.mxu0 0
      %300 = vmatpush1.bf16.msra.mxu0 0
      %301 = vmatprep.subr.bf16.mxu0 0
      %302 = vmatpush1.bf16.msra.mxu0 0
      %303 = vmatprep.subr.bf16.mxu0 0
      %304 = vmatpush1.bf16.msra.mxu0 0
      %305 = vmatprep.subr.bf16.mxu0 0
      %306 = vmatpush1.bf16.msra.mxu0 0
      %307 = vmatprep.subr.bf16.mxu0 0
      %308 = vmatpush1.bf16.msra.mxu0 0
      %309 = vmatprep.subr.bf16.mxu0 0
      %310 = vmatpush1.bf16.msra.mxu0 0
      %311 = vmatprep.subr.bf16.mxu0 0
      %312 = vmatpush1.bf16.msra.mxu0 0
      %313 = vmatprep.subr.bf16.mxu0 0
      %314 = vmatpush1.bf16.msra.mxu0 0
      %315 = vmatprep.mubr.bf16.mxu0 0
      %316 = vmatmul.mubr.bf16.gmra.mrb[0].mxu0 %v225
      %v317 = vpop.f32.mrb[0].mxu0
      %v318 = vadd.f32 0.0, %v317
      %v319 = vpop.f32.mrb[0].mxu0
      %v320 = vpop.f32.mrb[0].mxu0
      %v321 = vadd.f32 0.0, %v320
      %v322 = vpop.f32.mrb[0].mxu0
      %323 = vmatprep.mubr.bf16.mxu0 0
      %324 = vmatmul.mubr.bf16.gmra.mrb[0].mxu0 %v226
      %v325 = vpop.f32.mrb[0].mxu0
      %v326 = vadd.f32 0.0, %v325
      %v327 = vpop.f32.mrb[0].mxu0
      %v328 = vpop.f32.mrb[0].mxu0
      %v329 = vadd.f32 0.0, %v328
      %v330 = vpop.f32.mrb[0].mxu0
      %331 = vmatprep.mubr.bf16.mxu0 0
      %332 = vmatmul.mubr.bf16.gmra.mrb[0].mxu0 %v227
      %v333 = vpop.f32.mrb[0].mxu0
      %v334 = vadd.f32 0.0, %v333
      %v335 = vpop.f32.mrb[0].mxu0
      %v336 = vpop.f32.mrb[0].mxu0
      %v337 = vadd.f32 0.0, %v336
      %v338 = vpop.f32.mrb[0].mxu0
      %339 = vmatprep.mubr.bf16.mxu0 0
      %340 = vmatmul.mubr.bf16.gmra.mrb[0].mxu0 %v228
      %v341 = vpop.f32.mrb[0].mxu0
      %v342 = vadd.f32 0.0, %v341
      %v343 = vpop.f32.mrb[0].mxu0
      %v344 = vpop.f32.mrb[0].mxu0
      %v345 = vadd.f32 0.0, %v344
      %v346 = vpop.f32.mrb[0].mxu0
      %347 = vmatprep.mubr.bf16.mxu0 0
      %348 = vmatmul.mubr.bf16.gmra.mrb[0].mxu0 %v229
      %v349 = vpop.f32.mrb[0].mxu0
      %v350 = vadd.f32 0.0, %v349
      %v351 = vpop.f32.mrb[0].mxu0
      %v352 = vpop.f32.mrb[0].mxu0
      %v353 = vpop.f32.mrb[0].mxu0
      %354 = vdwg.mxu0
      %355 = vst [vmem:[#allocation2] sm:$0xff] %v318
      %356 = vst [vmem:[#allocation2 + $0x8] sm:$0xff] %v321
      %357 = vst [vmem:[#allocation2 + $0x10] sm:$0xff] %v326
      %358 = vst [vmem:[#allocation2 + $0x18] sm:$0xff] %v329
      %359 = vst [vmem:[#allocation2 + $0x20] sm:$0xff] %v334
      %360 = vst [vmem:[#allocation2 + $0x28] sm:$0xff] %v337
      %361 = vst [vmem:[#allocation2 + $0x30] sm:$0xff] %v342
      %362 = vst [vmem:[#allocation2 + $0x38] sm:$0xff] %v345
      %363 = vst [vmem:[#allocation2 + $0x40] sm:$0xff] %v350
      %v364 = vld [vmem:[%s168] sm:$0xf]
      %v365 = vld [vmem:[%s168 + $0x4] sm:$0xf]
      %v366 = vld [vmem:[%s168 + $0x8] sm:$0xf]
      %v367 = vld [vmem:[%s168 + $0xc] sm:$0xf]
      %v368 = vld [vmem:[%s168 + $0x10] sm:$0xf]
      %v369 = vld [vmem:[%s168 + $0x14] sm:$0xf]
      %v370 = vld [vmem:[%s168 + $0x18] sm:$0xf]
      %v371 = vld [vmem:[%s168 + $0x1c] sm:$0xf]
      %v372 = vld [vmem:[%s168 + $0x20] sm:$0xf]
      %v373 = vld [vmem:[%s168 + $0x24] sm:$0x1]
      %s374 = scalar_lea.vmem %s172, 64
      %v375 = vld [vmem:[%s374] sm:$0xf]
      %v376 = vld [vmem:[%s374 + $0x4] sm:$0xf]
      %v377 = vld [vmem:[%s374 + $0x8] sm:$0xf]
      %v378 = vld [vmem:[%s374 + $0xc] sm:$0xf]
      %v379 = vld [vmem:[%s374 + $0x10] sm:$0xf]
      %v380 = vld [vmem:[%s374 + $0x14] sm:$0xf]
      %v381 = vld [vmem:[%s374 + $0x18] sm:$0xf]
      %v382 = vld [vmem:[%s374 + $0x1c] sm:$0xf]
      %v383 = vld [vmem:[%s374 + $0x20] sm:$0xf]
      %v384 = vld [vmem:[%s374 + $0x24] sm:$0xf]
      %v385 = vld [vmem:[%s374 + $0x28] sm:$0xf]
      %v386 = vld [vmem:[%s374 + $0x2c] sm:$0xf]
      %v387 = vld [vmem:[%s374 + $0x30] sm:$0xf]
      %v388 = vld [vmem:[%s374 + $0x34] sm:$0xf]
      %v389 = vld [vmem:[%s374 + $0x38] sm:$0xf]
      %v390 = vld [vmem:[%s374 + $0x3c] sm:$0xf]
      %v401 = vunpack.c.l.b16 %v364
      %v402 = vunpack.c.l.b16 %v365
      %v403 = vunpack.c.l.b16 %v366
      %v404 = vunpack.c.l.b16 %v367
      %v405 = vunpack.c.l.b16 %v368
      %v406 = vunpack.c.l.b16 %v369
      %v407 = vunpack.c.l.b16 %v370
      %v408 = vunpack.c.l.b16 %v371
      %v409 = vunpack.c.l.b16 %v372
      %v410 = vunpack.c.l.b16 %v373
      %v411 = vpack.c.b16 %v402, %v401
      %v412 = vpack.c.b16 %v404, %v403
      %v413 = vpack.c.b16 %v406, %v405
      %v414 = vpack.c.b16 %v408, %v407
      %v415 = vpack.c.b16 %v410, %v409
      %vm416 = vsmask.f32 7424
      %v418 = vshrl.u32 %v411, 16
      %v420 = vshll.u32 %v411, 16
      %v422 = vrot.slane %v420, 1
      %v423 = vor.u32 %v418, %v422
      %v425 = vshll.u32 %v412, 16
      %v427 = vrot.slane %v425, 1
      %v428 = vsel %vm416, %v423, %v427
      %v429 = vshrl.u32 %v412, 16
      %v431 = vor.u32 %v429, %v427
      %v433 = vshll.u32 %v413, 16
      %v435 = vrot.slane %v433, 1
      %v436 = vsel %vm416, %v431, %v435
      %v437 = vshrl.u32 %v413, 16
      %v439 = vor.u32 %v437, %v435
      %v441 = vshll.u32 %v414, 16
      %v443 = vrot.slane %v441, 1
      %v444 = vsel %vm416, %v439, %v443
      %v445 = vshrl.u32 %v414, 16
      %v447 = vor.u32 %v445, %v443
      %v449 = vshll.u32 %v415, 16
      %v451 = vrot.slane %v449, 1
      %v452 = vsel %vm416, %v447, %v451
      %v453 = vshrl.u32 %v415, 16
      %v455 = vor.u32 %v453, %v451
      %v477 = vunpack.c.l.b16 %v375
      %v478 = vunpack.c.l.b16 %v376
      %v479 = vunpack.c.l.b16 %v377
      %v480 = vunpack.c.l.b16 %v378
      %v481 = vunpack.c.l.b16 %v379
      %v482 = vunpack.c.l.b16 %v380
      %v483 = vunpack.c.l.b16 %v381
      %v484 = vunpack.c.l.b16 %v382
      %v485 = vunpack.c.l.b16 %v383
      %v486 = vunpack.c.l.b16 %v384
      %v487 = vunpack.c.l.b16 %v385
      %v488 = vunpack.c.l.b16 %v386
      %v489 = vunpack.c.l.b16 %v387
      %v490 = vunpack.c.l.b16 %v388
      %v491 = vunpack.c.l.b16 %v389
      %v492 = vunpack.c.l.b16 %v390
      %v493 = vpack.c.b16 %v478, %v477
      %v494 = vpack.c.b16 %v480, %v479
      %v495 = vpack.c.b16 %v482, %v481
      %v496 = vpack.c.b16 %v484, %v483
      %v497 = vpack.c.b16 %v486, %v485
      %v498 = vpack.c.b16 %v488, %v487
      %v499 = vpack.c.b16 %v490, %v489
      %v500 = vpack.c.b16 %v492, %v491
      %509 = vmatprep.subr.bf16.mxu0 0
      %510 = vmatpush1.bf16.msra.mxu0 %v493
      %511 = vmatprep.subr.bf16.mxu0 0
      %512 = vmatpush1.bf16.msra.mxu0 %v494
      %513 = vmatprep.subr.bf16.mxu0 0
      %514 = vmatpush1.bf16.msra.mxu0 %v495
      %515 = vmatprep.subr.bf16.mxu0 0
      %516 = vmatpush1.bf16.msra.mxu0 %v496
      %517 = vmatprep.subr.bf16.mxu0 0
      %518 = vmatpush1.bf16.msra.mxu0 %v497
      %519 = vmatprep.subr.bf16.mxu0 0
      %520 = vmatpush1.bf16.msra.mxu0 %v498
      %521 = vmatprep.subr.bf16.mxu0 0
      %522 = vmatpush1.bf16.msra.mxu0 %v499
      %523 = vmatprep.subr.bf16.mxu0 0
      %524 = vmatpush1.bf16.msra.mxu0 %v500
      %525 = vmatprep.subr.bf16.mxu0 0
      %526 = vmatpush1.bf16.msra.mxu0 0
      %527 = vmatprep.subr.bf16.mxu0 0
      %528 = vmatpush1.bf16.msra.mxu0 0
      %529 = vmatprep.subr.bf16.mxu0 0
      %530 = vmatpush1.bf16.msra.mxu0 0
      %531 = vmatprep.subr.bf16.mxu0 0
      %532 = vmatpush1.bf16.msra.mxu0 0
      %533 = vmatprep.subr.bf16.mxu0 0
      %534 = vmatpush1.bf16.msra.mxu0 0
      %535 = vmatprep.subr.bf16.mxu0 0
      %536 = vmatpush1.bf16.msra.mxu0 0
      %537 = vmatprep.subr.bf16.mxu0 0
      %538 = vmatpush1.bf16.msra.mxu0 0
      %539 = vmatprep.subr.bf16.mxu0 0
      %540 = vmatpush1.bf16.msra.mxu0 0
      %541 = vmatprep.mubr.bf16.mxu0 0
      %542 = vmatmul.mubr.bf16.gmra.mrb[0].mxu0 %v428
      %v543 = vpop.f32.mrb[0].mxu0
      %v544 = vadd.f32 0.0, %v543
      %v545 = vpop.f32.mrb[0].mxu0
      %v546 = vpop.f32.mrb[0].mxu0
      %v547 = vadd.f32 0.0, %v546
      %v548 = vpop.f32.mrb[0].mxu0
      %549 = vmatprep.mubr.bf16.mxu0 0
      %550 = vmatmul.mubr.bf16.gmra.mrb[0].mxu0 %v436
      %v551 = vpop.f32.mrb[0].mxu0
      %v552 = vadd.f32 0.0, %v551
      %v553 = vpop.f32.mrb[0].mxu0
      %v554 = vpop.f32.mrb[0].mxu0
      %v555 = vadd.f32 0.0, %v554
      %v556 = vpop.f32.mrb[0].mxu0
      %557 = vmatprep.mubr.bf16.mxu0 0
      %558 = vmatmul.mubr.bf16.gmra.mrb[0].mxu0 %v444
      %v559 = vpop.f32.mrb[0].mxu0
      %v560 = vadd.f32 0.0, %v559
      %v561 = vpop.f32.mrb[0].mxu0
      %v562 = vpop.f32.mrb[0].mxu0
      %v563 = vadd.f32 0.0, %v562
      %v564 = vpop.f32.mrb[0].mxu0
      %565 = vmatprep.mubr.bf16.mxu0 0
      %566 = vmatmul.mubr.bf16.gmra.mrb[0].mxu0 %v452
      %v567 = vpop.f32.mrb[0].mxu0
      %v568 = vadd.f32 0.0, %v567
      %v569 = vpop.f32.mrb[0].mxu0
      %v570 = vpop.f32.mrb[0].mxu0
      %v571 = vadd.f32 0.0, %v570
      %v572 = vpop.f32.mrb[0].mxu0
      %573 = vmatprep.mubr.bf16.mxu0 0
      %574 = vmatmul.mubr.bf16.gmra.mrb[0].mxu0 %v455
      %v575 = vpop.f32.mrb[0].mxu0
      %v576 = vadd.f32 0.0, %v575
      %v577 = vpop.f32.mrb[0].mxu0
      %v578 = vpop.f32.mrb[0].mxu0
      %v579 = vpop.f32.mrb[0].mxu0
      %580 = vdwg.mxu0
      %v581 = vld [vmem:[#allocation2] sm:$0xff]
      %v582 = vld [vmem:[#allocation2 + $0x8] sm:$0xff]
      %v583 = vld [vmem:[#allocation2 + $0x10] sm:$0xff]
      %v584 = vld [vmem:[#allocation2 + $0x18] sm:$0xff]
      %v585 = vld [vmem:[#allocation2 + $0x20] sm:$0xff]
      %v586 = vld [vmem:[#allocation2 + $0x28] sm:$0xff]
      %v587 = vld [vmem:[#allocation2 + $0x30] sm:$0xff]
      %v588 = vld [vmem:[#allocation2 + $0x38] sm:$0xff]
      %v589 = vld [vmem:[#allocation2 + $0x40] sm:$0xff]
      %v590 = vadd.f32 %v581, %v544
      %v591 = vadd.f32 %v582, %v547
      %v592 = vadd.f32 %v583, %v552
      %v593 = vadd.f32 %v584, %v555
      %v594 = vadd.f32 %v585, %v560
      %v595 = vadd.f32 %v586, %v563
      %v596 = vadd.f32 %v587, %v568
      %v597 = vadd.f32 %v588, %v571
      %v598 = vadd.f32 %v589, %v576
      %599 = vst [vmem:[#allocation2] sm:$0xff] %v590
      %600 = vst [vmem:[#allocation2 + $0x8] sm:$0xff] %v591
      %601 = vst [vmem:[#allocation2 + $0x10] sm:$0xff] %v592
      %602 = vst [vmem:[#allocation2 + $0x18] sm:$0xff] %v593
      %603 = vst [vmem:[#allocation2 + $0x20] sm:$0xff] %v594
      %604 = vst [vmem:[#allocation2 + $0x28] sm:$0xff] %v595
      %605 = vst [vmem:[#allocation2 + $0x30] sm:$0xff] %v596
      %606 = vst [vmem:[#allocation2 + $0x38] sm:$0xff] %v597
      %607 = vst [vmem:[#allocation2 + $0x40] sm:$0xff] %v598
      %v608 = vld [vmem:[%s168 + $0x4] sm:$0xf]
      %v609 = vld [vmem:[%s168 + $0x8] sm:$0xf]
      %v610 = vld [vmem:[%s168 + $0xc] sm:$0xf]
      %v611 = vld [vmem:[%s168 + $0x10] sm:$0xf]
      %v612 = vld [vmem:[%s168 + $0x14] sm:$0xf]
      %v613 = vld [vmem:[%s168 + $0x18] sm:$0xf]
      %v614 = vld [vmem:[%s168 + $0x1c] sm:$0xf]
      %v615 = vld [vmem:[%s168 + $0x20] sm:$0xf]
      %v616 = vld [vmem:[%s168 + $0x24] sm:$0xf]
      %v617 = vld [vmem:[%s168 + $0x28] sm:$0x1]
      %s618 = scalar_lea.vmem %s172, 128
      %v619 = vld [vmem:[%s618] sm:$0xf]
      %v620 = vld [vmem:[%s618 + $0x4] sm:$0xf]
      %v621 = vld [vmem:[%s618 + $0x8] sm:$0xf]
      %v622 = vld [vmem:[%s618 + $0xc] sm:$0xf]
      %v623 = vld [vmem:[%s618 + $0x10] sm:$0xf]
      %v624 = vld [vmem:[%s618 + $0x14] sm:$0xf]
      %v625 = vld [vmem:[%s618 + $0x18] sm:$0xf]
      %v626 = vld [vmem:[%s618 + $0x1c] sm:$0xf]
      %v627 = vld [vmem:[%s618 + $0x20] sm:$0xf]
      %v628 = vld [vmem:[%s618 + $0x24] sm:$0xf]
      %v629 = vld [vmem:[%s618 + $0x28] sm:$0xf]
      %v630 = vld [vmem:[%s618 + $0x2c] sm:$0xf]
      %v631 = vld [vmem:[%s618 + $0x30] sm:$0xf]
      %v632 = vld [vmem:[%s618 + $0x34] sm:$0xf]
      %v633 = vld [vmem:[%s618 + $0x38] sm:$0xf]
      %v634 = vld [vmem:[%s618 + $0x3c] sm:$0xf]
      %v645 = vunpack.c.l.b16 %v608
      %v646 = vunpack.c.l.b16 %v609
      %v647 = vunpack.c.l.b16 %v610
      %v648 = vunpack.c.l.b16 %v611
      %v649 = vunpack.c.l.b16 %v612
      %v650 = vunpack.c.l.b16 %v613
      %v651 = vunpack.c.l.b16 %v614
      %v652 = vunpack.c.l.b16 %v615
      %v653 = vunpack.c.l.b16 %v616
      %v654 = vunpack.c.l.b16 %v617
      %v655 = vpack.c.b16 %v646, %v645
      %v656 = vpack.c.b16 %v648, %v647
      %v657 = vpack.c.b16 %v650, %v649
      %v658 = vpack.c.b16 %v652, %v651
      %v659 = vpack.c.b16 %v654, %v653
      %v661 = vshrl.u32 %v655, 16
      %v663 = vshll.u32 %v655, 16
      %v665 = vrot.slane %v663, 1
      %v666 = vor.u32 %v661, %v665
      %v668 = vshll.u32 %v656, 16
      %v670 = vrot.slane %v668, 1
      %v671 = vsel %vm416, %v666, %v670
      %v672 = vshrl.u32 %v656, 16
      %v674 = vor.u32 %v672, %v670
      %v676 = vshll.u32 %v657, 16
      %v678 = vrot.slane %v676, 1
      %v679 = vsel %vm416, %v674, %v678
      %v680 = vshrl.u32 %v657, 16
      %v682 = vor.u32 %v680, %v678
      %v684 = vshll.u32 %v658, 16
      %v686 = vrot.slane %v684, 1
      %v687 = vsel %vm416, %v682, %v686
      %v688 = vshrl.u32 %v658, 16
      %v690 = vor.u32 %v688, %v686
      %v692 = vshll.u32 %v659, 16
      %v694 = vrot.slane %v692, 1
      %v695 = vsel %vm416, %v690, %v694
      %v696 = vshrl.u32 %v659, 16
      %v698 = vor.u32 %v696, %v694
      %v720 = vunpack.c.l.b16 %v619
      %v721 = vunpack.c.l.b16 %v620
      %v722 = vunpack.c.l.b16 %v621
      %v723 = vunpack.c.l.b16 %v622
      %v724 = vunpack.c.l.b16 %v623
      %v725 = vunpack.c.l.b16 %v624
      %v726 = vunpack.c.l.b16 %v625
      %v727 = vunpack.c.l.b16 %v626
      %v728 = vunpack.c.l.b16 %v627
      %v729 = vunpack.c.l.b16 %v628
      %v730 = vunpack.c.l.b16 %v629
      %v731 = vunpack.c.l.b16 %v630
      %v732 = vunpack.c.l.b16 %v631
      %v733 = vunpack.c.l.b16 %v632
      %v734 = vunpack.c.l.b16 %v633
      %v735 = vunpack.c.l.b16 %v634
      %v736 = vpack.c.b16 %v721, %v720
      %v737 = vpack.c.b16 %v723, %v722
      %v738 = vpack.c.b16 %v725, %v724
      %v739 = vpack.c.b16 %v727, %v726
      %v740 = vpack.c.b16 %v729, %v728
      %v741 = vpack.c.b16 %v731, %v730
      %v742 = vpack.c.b16 %v733, %v732
      %v743 = vpack.c.b16 %v735, %v734
      %752 = vmatprep.subr.bf16.mxu0 0
      %753 = vmatpush1.bf16.msra.mxu0 %v736
      %754 = vmatprep.subr.bf16.mxu0 0
      %755 = vmatpush1.bf16.msra.mxu0 %v737
      %756 = vmatprep.subr.bf16.mxu0 0
      %757 = vmatpush1.bf16.msra.mxu0 %v738
      %758 = vmatprep.subr.bf16.mxu0 0
      %759 = vmatpush1.bf16.msra.mxu0 %v739
      %760 = vmatprep.subr.bf16.mxu0 0
      %761 = vmatpush1.bf16.msra.mxu0 %v740
      %762 = vmatprep.subr.bf16.mxu0 0
      %763 = vmatpush1.bf16.msra.mxu0 %v741
      %764 = vmatprep.subr.bf16.mxu0 0
      %765 = vmatpush1.bf16.msra.mxu0 %v742
      %766 = vmatprep.subr.bf16.mxu0 0
      %767 = vmatpush1.bf16.msra.mxu0 %v743
      %768 = vmatprep.subr.bf16.mxu0 0
      %769 = vmatpush1.bf16.msra.mxu0 0
      %770 = vmatprep.subr.bf16.mxu0 0
      %771 = vmatpush1.bf16.msra.mxu0 0
      %772 = vmatprep.subr.bf16.mxu0 0
      %773 = vmatpush1.bf16.msra.mxu0 0
      %774 = vmatprep.subr.bf16.mxu0 0
      %775 = vmatpush1.bf16.msra.mxu0 0
      %776 = vmatprep.subr.bf16.mxu0 0
      %777 = vmatpush1.bf16.msra.mxu0 0
      %778 = vmatprep.subr.bf16.mxu0 0
      %779 = vmatpush1.bf16.msra.mxu0 0
      %780 = vmatprep.subr.bf16.mxu0 0
      %781 = vmatpush1.bf16.msra.mxu0 0
      %782 = vmatprep.subr.bf16.mxu0 0
      %783 = vmatpush1.bf16.msra.mxu0 0
      %784 = vmatprep.mubr.bf16.mxu0 0
      %785 = vmatmul.mubr.bf16.gmra.mrb[0].mxu0 %v671
      %v786 = vpop.f32.mrb[0].mxu0
      %v787 = vadd.f32 0.0, %v786
      %v788 = vpop.f32.mrb[0].mxu0
      %v789 = vpop.f32.mrb[0].mxu0
      %v790 = vadd.f32 0.0, %v789
      %v791 = vpop.f32.mrb[0].mxu0
      %792 = vmatprep.mubr.bf16.mxu0 0
      %793 = vmatmul.mubr.bf16.gmra.mrb[0].mxu0 %v679
      %v794 = vpop.f32.mrb[0].mxu0
      %v795 = vadd.f32 0.0, %v794
      %v796 = vpop.f32.mrb[0].mxu0
      %v797 = vpop.f32.mrb[0].mxu0
      %v798 = vadd.f32 0.0, %v797
      %v799 = vpop.f32.mrb[0].mxu0
      %800 = vmatprep.mubr.bf16.mxu0 0
      %801 = vmatmul.mubr.bf16.gmra.mrb[0].mxu0 %v687
      %v802 = vpop.f32.mrb[0].mxu0
      %v803 = vadd.f32 0.0, %v802
      %v804 = vpop.f32.mrb[0].mxu0
      %v805 = vpop.f32.mrb[0].mxu0
      %v806 = vadd.f32 0.0, %v805
      %v807 = vpop.f32.mrb[0].mxu0
      %808 = vmatprep.mubr.bf16.mxu0 0
      %809 = vmatmul.mubr.bf16.gmra.mrb[0].mxu0 %v695
      %v810 = vpop.f32.mrb[0].mxu0
      %v811 = vadd.f32 0.0, %v810
      %v812 = vpop.f32.mrb[0].mxu0
      %v813 = vpop.f32.mrb[0].mxu0
      %v814 = vadd.f32 0.0, %v813
      %v815 = vpop.f32.mrb[0].mxu0
      %816 = vmatprep.mubr.bf16.mxu0 0
      %817 = vmatmul.mubr.bf16.gmra.mrb[0].mxu0 %v698
      %v818 = vpop.f32.mrb[0].mxu0
      %v819 = vadd.f32 0.0, %v818
      %v820 = vpop.f32.mrb[0].mxu0
      %v821 = vpop.f32.mrb[0].mxu0
      %v822 = vpop.f32.mrb[0].mxu0
      %823 = vdwg.mxu0
      %v824 = vld [vmem:[#allocation2] sm:$0xff]
      %v825 = vld [vmem:[#allocation2 + $0x8] sm:$0xff]
      %v826 = vld [vmem:[#allocation2 + $0x10] sm:$0xff]
      %v827 = vld [vmem:[#allocation2 + $0x18] sm:$0xff]
      %v828 = vld [vmem:[#allocation2 + $0x20] sm:$0xff]
      %v829 = vld [vmem:[#allocation2 + $0x28] sm:$0xff]
      %v830 = vld [vmem:[#allocation2 + $0x30] sm:$0xff]
      %v831 = vld [vmem:[#allocation2 + $0x38] sm:$0xff]
      %v832 = vld [vmem:[#allocation2 + $0x40] sm:$0xff]
      %v833 = vadd.f32 %v824, %v787
      %v834 = vadd.f32 %v825, %v790
      %v835 = vadd.f32 %v826, %v795
      %v836 = vadd.f32 %v827, %v798
      %v837 = vadd.f32 %v828, %v803
      %v838 = vadd.f32 %v829, %v806
      %v839 = vadd.f32 %v830, %v811
      %v840 = vadd.f32 %v831, %v814
      %v841 = vadd.f32 %v832, %v819
      %842 = vst [vmem:[#allocation2] sm:$0xff] %v833
      %843 = vst [vmem:[#allocation2 + $0x8] sm:$0xff] %v834
      %844 = vst [vmem:[#allocation2 + $0x10] sm:$0xff] %v835
      %845 = vst [vmem:[#allocation2 + $0x18] sm:$0xff] %v836
      %846 = vst [vmem:[#allocation2 + $0x20] sm:$0xff] %v837
      %847 = vst [vmem:[#allocation2 + $0x28] sm:$0xff] %v838
      %848 = vst [vmem:[#allocation2 + $0x30] sm:$0xff] %v839
      %849 = vst [vmem:[#allocation2 + $0x38] sm:$0xff] %v840
      %850 = vst [vmem:[#allocation2 + $0x40] sm:$0xff] %v841
      %v851 = vld [vmem:[%s168 + $0x4] sm:$0xe]
      %v852 = vld [vmem:[%s168 + $0x8] sm:$0xf]
      %v853 = vld [vmem:[%s168 + $0xc] sm:$0xf]
      %v854 = vld [vmem:[%s168 + $0x10] sm:$0xf]
      %v855 = vld [vmem:[%s168 + $0x14] sm:$0xf]
      %v856 = vld [vmem:[%s168 + $0x18] sm:$0xf]
      %v857 = vld [vmem:[%s168 + $0x1c] sm:$0xf]
      %v858 = vld [vmem:[%s168 + $0x20] sm:$0xf]
      %v859 = vld [vmem:[%s168 + $0x24] sm:$0xf]
      %v860 = vld [vmem:[%s168 + $0x28] sm:$0x1]
      %s861 = scalar_lea.vmem %s172, 192
      %v862 = vld [vmem:[%s861] sm:$0xf]
      %v863 = vld [vmem:[%s861 + $0x4] sm:$0xf]
      %v864 = vld [vmem:[%s861 + $0x8] sm:$0xf]
      %v865 = vld [vmem:[%s861 + $0xc] sm:$0xf]
      %v866 = vld [vmem:[%s861 + $0x10] sm:$0xf]
      %v867 = vld [vmem:[%s861 + $0x14] sm:$0xf]
      %v868 = vld [vmem:[%s861 + $0x18] sm:$0xf]
      %v869 = vld [vmem:[%s861 + $0x1c] sm:$0xf]
      %v870 = vld [vmem:[%s861 + $0x20] sm:$0xf]
      %v871 = vld [vmem:[%s861 + $0x24] sm:$0xf]
      %v872 = vld [vmem:[%s861 + $0x28] sm:$0xf]
      %v873 = vld [vmem:[%s861 + $0x2c] sm:$0xf]
      %v874 = vld [vmem:[%s861 + $0x30] sm:$0xf]
      %v875 = vld [vmem:[%s861 + $0x34] sm:$0xf]
      %v876 = vld [vmem:[%s861 + $0x38] sm:$0xf]
      %v877 = vld [vmem:[%s861 + $0x3c] sm:$0xf]
      %v888 = vunpack.c.l.b16 %v851
      %v889 = vunpack.c.l.b16 %v852
      %v890 = vunpack.c.l.b16 %v853
      %v891 = vunpack.c.l.b16 %v854
      %v892 = vunpack.c.l.b16 %v855
      %v893 = vunpack.c.l.b16 %v856
      %v894 = vunpack.c.l.b16 %v857
      %v895 = vunpack.c.l.b16 %v858
      %v896 = vunpack.c.l.b16 %v859
      %v897 = vunpack.c.l.b16 %v860
      %v898 = vpack.c.b16 %v889, %v888
      %v899 = vpack.c.b16 %v891, %v890
      %v900 = vpack.c.b16 %v893, %v892
      %v901 = vpack.c.b16 %v895, %v894
      %v902 = vpack.c.b16 %v897, %v896
      %vm903 = vcmask 1046528
      %v904 = vrot.slane %v898, 1
      %v905 = vrot.slane %v899, 1
      %v906 = vsel %vm903, %v904, %v905
      %v907 = vrot.slane %v900, 1
      %v908 = vsel %vm903, %v905, %v907
      %v909 = vrot.slane %v901, 1
      %v910 = vsel %vm903, %v907, %v909
      %v911 = vrot.slane %v902, 1
      %v912 = vsel %vm903, %v909, %v911
      %v934 = vunpack.c.l.b16 %v862
      %v935 = vunpack.c.l.b16 %v863
      %v936 = vunpack.c.l.b16 %v864
      %v937 = vunpack.c.l.b16 %v865
      %v938 = vunpack.c.l.b16 %v866
      %v939 = vunpack.c.l.b16 %v867
      %v940 = vunpack.c.l.b16 %v868
      %v941 = vunpack.c.l.b16 %v869
      %v942 = vunpack.c.l.b16 %v870
      %v943 = vunpack.c.l.b16 %v871
      %v944 = vunpack.c.l.b16 %v872
      %v945 = vunpack.c.l.b16 %v873
      %v946 = vunpack.c.l.b16 %v874
      %v947 = vunpack.c.l.b16 %v875
      %v948 = vunpack.c.l.b16 %v876
      %v949 = vunpack.c.l.b16 %v877
      %v950 = vpack.c.b16 %v935, %v934
      %v951 = vpack.c.b16 %v937, %v936
      %v952 = vpack.c.b16 %v939, %v938
      %v953 = vpack.c.b16 %v941, %v940
      %v954 = vpack.c.b16 %v943, %v942
      %v955 = vpack.c.b16 %v945, %v944
      %v956 = vpack.c.b16 %v947, %v946
      %v957 = vpack.c.b16 %v949, %v948
      %966 = vmatprep.subr.bf16.mxu0 0
      %967 = vmatpush1.bf16.msra.mxu0 %v950
      %968 = vmatprep.subr.bf16.mxu0 0
      %969 = vmatpush1.bf16.msra.mxu0 %v951
      %970 = vmatprep.subr.bf16.mxu0 0
      %971 = vmatpush1.bf16.msra.mxu0 %v952
      %972 = vmatprep.subr.bf16.mxu0 0
      %973 = vmatpush1.bf16.msra.mxu0 %v953
      %974 = vmatprep.subr.bf16.mxu0 0
      %975 = vmatpush1.bf16.msra.mxu0 %v954
      %976 = vmatprep.subr.bf16.mxu0 0
      %977 = vmatpush1.bf16.msra.mxu0 %v955
      %978 = vmatprep.subr.bf16.mxu0 0
      %979 = vmatpush1.bf16.msra.mxu0 %v956
      %980 = vmatprep.subr.bf16.mxu0 0
      %981 = vmatpush1.bf16.msra.mxu0 %v957
      %982 = vmatprep.subr.bf16.mxu0 0
      %983 = vmatpush1.bf16.msra.mxu0 0
      %984 = vmatprep.subr.bf16.mxu0 0
      %985 = vmatpush1.bf16.msra.mxu0 0
      %986 = vmatprep.subr.bf16.mxu0 0
      %987 = vmatpush1.bf16.msra.mxu0 0
      %988 = vmatprep.subr.bf16.mxu0 0
      %989 = vmatpush1.bf16.msra.mxu0 0
      %990 = vmatprep.subr.bf16.mxu0 0
      %991 = vmatpush1.bf16.msra.mxu0 0
      %992 = vmatprep.subr.bf16.mxu0 0
      %993 = vmatpush1.bf16.msra.mxu0 0
      %994 = vmatprep.subr.bf16.mxu0 0
      %995 = vmatpush1.bf16.msra.mxu0 0
      %996 = vmatprep.subr.bf16.mxu0 0
      %997 = vmatpush1.bf16.msra.mxu0 0
      %998 = vmatprep.mubr.bf16.mxu0 0
      %999 = vmatmul.mubr.bf16.gmra.mrb[0].mxu0 %v906
      %v1000 = vpop.f32.mrb[0].mxu0
      %v1001 = vadd.f32 0.0, %v1000
      %v1002 = vpop.f32.mrb[0].mxu0
      %v1003 = vpop.f32.mrb[0].mxu0
      %v1004 = vadd.f32 0.0, %v1003
      %v1005 = vpop.f32.mrb[0].mxu0
      %1006 = vmatprep.mubr.bf16.mxu0 0
      %1007 = vmatmul.mubr.bf16.gmra.mrb[0].mxu0 %v908
      %v1008 = vpop.f32.mrb[0].mxu0
      %v1009 = vadd.f32 0.0, %v1008
      %v1010 = vpop.f32.mrb[0].mxu0
      %v1011 = vpop.f32.mrb[0].mxu0
      %v1012 = vadd.f32 0.0, %v1011
      %v1013 = vpop.f32.mrb[0].mxu0
      %1014 = vmatprep.mubr.bf16.mxu0 0
      %1015 = vmatmul.mubr.bf16.gmra.mrb[0].mxu0 %v910
      %v1016 = vpop.f32.mrb[0].mxu0
      %v1017 = vadd.f32 0.0, %v1016
      %v1018 = vpop.f32.mrb[0].mxu0
      %v1019 = vpop.f32.mrb[0].mxu0
      %v1020 = vadd.f32 0.0, %v1019
      %v1021 = vpop.f32.mrb[0].mxu0
      %1022 = vmatprep.mubr.bf16.mxu0 0
      %1023 = vmatmul.mubr.bf16.gmra.mrb[0].mxu0 %v912
      %v1024 = vpop.f32.mrb[0].mxu0
      %v1025 = vadd.f32 0.0, %v1024
      %v1026 = vpop.f32.mrb[0].mxu0
      %v1027 = vpop.f32.mrb[0].mxu0
      %v1028 = vadd.f32 0.0, %v1027
      %v1029 = vpop.f32.mrb[0].mxu0
      %1030 = vmatprep.mubr.bf16.mxu0 0
      %1031 = vmatmul.mubr.bf16.gmra.mrb[0].mxu0 %v911
      %v1032 = vpop.f32.mrb[0].mxu0
      %v1033 = vadd.f32 0.0, %v1032
      %v1034 = vpop.f32.mrb[0].mxu0
      %v1035 = vpop.f32.mrb[0].mxu0
      %v1036 = vpop.f32.mrb[0].mxu0
      %1037 = vdwg.mxu0
      %v1038 = vld [vmem:[#allocation2] sm:$0xff]
      %v1039 = vld [vmem:[#allocation2 + $0x8] sm:$0xff]
      %v1040 = vld [vmem:[#allocation2 + $0x10] sm:$0xff]
      %v1041 = vld [vmem:[#allocation2 + $0x18] sm:$0xff]
      %v1042 = vld [vmem:[#allocation2 + $0x20] sm:$0xff]
      %v1043 = vld [vmem:[#allocation2 + $0x28] sm:$0xff]
      %v1044 = vld [vmem:[#allocation2 + $0x30] sm:$0xff]
      %v1045 = vld [vmem:[#allocation2 + $0x38] sm:$0xff]
      %v1046 = vld [vmem:[#allocation2 + $0x40] sm:$0xff]
      %v1047 = vadd.f32 %v1038, %v1001
      %v1048 = vadd.f32 %v1039, %v1004
      %v1049 = vadd.f32 %v1040, %v1009
      %v1050 = vadd.f32 %v1041, %v1012
      %v1051 = vadd.f32 %v1042, %v1017
      %v1052 = vadd.f32 %v1043, %v1020
      %v1053 = vadd.f32 %v1044, %v1025
      %v1054 = vadd.f32 %v1045, %v1028
      %v1055 = vadd.f32 %v1046, %v1033
      %1056 = vst [vmem:[#allocation2] sm:$0xff] %v1047
      %1057 = vst [vmem:[#allocation2 + $0x8] sm:$0xff] %v1048
      %1058 = vst [vmem:[#allocation2 + $0x10] sm:$0xff] %v1049
      %1059 = vst [vmem:[#allocation2 + $0x18] sm:$0xff] %v1050
      %1060 = vst [vmem:[#allocation2 + $0x20] sm:$0xff] %v1051
      %1061 = vst [vmem:[#allocation2 + $0x28] sm:$0xff] %v1052
      %1062 = vst [vmem:[#allocation2 + $0x30] sm:$0xff] %v1053
      %1063 = vst [vmem:[#allocation2 + $0x38] sm:$0xff] %v1054
      %1064 = vst [vmem:[#allocation2 + $0x40] sm:$0xff] %v1055
      %v1065 = vld [vmem:[#allocation2] sm:$0xff]
      %v1066 = vld [vmem:[#allocation2 + $0x8] sm:$0xff]
      %v1067 = vld [vmem:[#allocation2 + $0x10] sm:$0xff]
      %v1068 = vld [vmem:[#allocation2 + $0x18] sm:$0xff]
      %v1069 = vld [vmem:[#allocation2 + $0x20] sm:$0xff]
      %v1070 = vld [vmem:[#allocation2 + $0x28] sm:$0xff]
      %v1071 = vld [vmem:[#allocation2 + $0x30] sm:$0xff]
      %v1072 = vld [vmem:[#allocation2 + $0x38] sm:$0xff]
      %v1073 = vld [vmem:[#allocation2 + $0x40] sm:$0xff]
      %v1074 = vlaneseq
      %v1075 = vshrl.u32 %v1074, 7
      %v1076 = vadd.s32 %v1075, 8
      %v1077 = vadd.s32 %v1075, 16
      %v1078 = vadd.s32 %v1075, 24
      %v1079 = vadd.s32 %v1075, 32
      %v1080 = vadd.s32 %v1075, 40
      %v1081 = vadd.s32 %v1075, 48
      %v1082 = vadd.s32 %v1075, 56
      %v1083 = vadd.s32 %v1075, 64
      %v1084 = vcvt.s32.f32 %v1075
      %v1085 = vcvt.s32.f32 %v1076
      %v1086 = vcvt.s32.f32 %v1077
      %v1087 = vcvt.s32.f32 %v1078
      %v1088 = vcvt.s32.f32 %v1079
      %v1089 = vcvt.s32.f32 %v1080
      %v1090 = vcvt.s32.f32 %v1081
      %v1091 = vcvt.s32.f32 %v1082
      %v1092 = vcvt.s32.f32 %v1083
      %v1093 = vadd.f32 %v1084, 0.5
      %v1094 = vadd.f32 %v1085, 0.5
      %v1095 = vadd.f32 %v1086, 0.5
      %v1096 = vadd.f32 %v1087, 0.5
      %v1097 = vadd.f32 %v1088, 0.5
      %v1098 = vadd.f32 %v1089, 0.5
      %v1099 = vadd.f32 %v1090, 0.5
      %v1100 = vadd.f32 %v1091, 0.5
      %v1101 = vadd.f32 %v1092, 0.5
      %v1102 = vmul.f32 %v1093, 0.11111111
      %v1103 = vmul.f32 %v1094, 0.11111111
      %v1104 = vmul.f32 %v1095, 0.11111111
      %v1105 = vmul.f32 %v1096, 0.11111111
      %v1106 = vmul.f32 %v1097, 0.11111111
      %v1107 = vmul.f32 %v1098, 0.11111111
      %v1108 = vmul.f32 %v1099, 0.11111111
      %v1109 = vmul.f32 %v1100, 0.11111111
      %v1110 = vmul.f32 %v1101, 0.11111111
      %v1111 = vfloor.f32 %v1102
      %v1112 = vfloor.f32 %v1103
      %v1113 = vfloor.f32 %v1104
      %v1114 = vfloor.f32 %v1105
      %v1115 = vfloor.f32 %v1106
      %v1116 = vfloor.f32 %v1107
      %v1117 = vfloor.f32 %v1108
      %v1118 = vfloor.f32 %v1109
      %v1119 = vfloor.f32 %v1110
      %v1120 = vmul.f32 %v1111, 9.0
      %v1121 = vmul.f32 %v1112, 9.0
      %v1122 = vmul.f32 %v1113, 9.0
      %v1123 = vmul.f32 %v1114, 9.0
      %v1124 = vmul.f32 %v1115, 9.0
      %v1125 = vmul.f32 %v1116, 9.0
      %v1126 = vmul.f32 %v1117, 9.0
      %v1127 = vmul.f32 %v1118, 9.0
      %v1128 = vmul.f32 %v1119, 9.0
      %v1129 = vsub.f32 %v1084, %v1120
      %v1130 = vsub.f32 %v1085, %v1121
      %v1131 = vsub.f32 %v1086, %v1122
      %v1132 = vsub.f32 %v1087, %v1123
      %v1133 = vsub.f32 %v1088, %v1124
      %v1134 = vsub.f32 %v1089, %v1125
      %v1135 = vsub.f32 %v1090, %v1126
      %v1136 = vsub.f32 %v1091, %v1127
      %v1137 = vsub.f32 %v1092, %v1128
      %vm1138 = vcmp.lt.f32.partialorder %v1129, 7.5
      %vm1139 = vcmp.lt.f32.partialorder %v1130, 7.5
      %vm1140 = vcmp.lt.f32.partialorder %v1131, 7.5
      %vm1141 = vcmp.lt.f32.partialorder %v1132, 7.5
      %vm1142 = vcmp.lt.f32.partialorder %v1133, 7.5
      %vm1143 = vcmp.lt.f32.partialorder %v1134, 7.5
      %vm1144 = vcmp.lt.f32.partialorder %v1135, 7.5
      %vm1145 = vcmp.lt.f32.partialorder %v1136, 7.5
      %vm1146 = vcmp.lt.f32.partialorder %v1137, 7.5
      %vm1147 = vcmp.lt.f32.partialorder %v1084, 71.5
      %vm1148 = vcmp.lt.f32.partialorder %v1085, 71.5
      %vm1149 = vcmp.lt.f32.partialorder %v1086, 71.5
      %vm1150 = vcmp.lt.f32.partialorder %v1087, 71.5
      %vm1151 = vcmp.lt.f32.partialorder %v1088, 71.5
      %vm1152 = vcmp.lt.f32.partialorder %v1089, 71.5
      %vm1153 = vcmp.lt.f32.partialorder %v1090, 71.5
      %vm1154 = vcmp.lt.f32.partialorder %v1091, 71.5
      %vm1155 = vcmp.lt.f32.partialorder %v1092, 71.5
      %vm1156 = vmand %vm1138, %vm1147
      %vm1157 = vmand %vm1139, %vm1148
      %vm1158 = vmand %vm1140, %vm1149
      %vm1159 = vmand %vm1141, %vm1150
      %vm1160 = vmand %vm1142, %vm1151
      %vm1161 = vmand %vm1143, %vm1152
      %vm1162 = vmand %vm1144, %vm1153
      %vm1163 = vmand %vm1145, %vm1154
      %vm1164 = vmand %vm1146, %vm1155
      %v1165 = vsel %vm1156, 1, 0
      %v1166 = vsel %vm1157, 1, 0
      %v1167 = vsel %vm1158, 1, 0
      %v1168 = vsel %vm1159, 1, 0
      %v1169 = vsel %vm1160, 1, 0
      %v1170 = vsel %vm1161, 1, 0
      %v1171 = vsel %vm1162, 1, 0
      %v1172 = vsel %vm1163, 1, 0
      %v1173 = vsel %vm1164, 1, 0
      %v1174 = vcvt.s32.f32 %v1165
      %v1175 = vcvt.s32.f32 %v1166
      %v1176 = vcvt.s32.f32 %v1167
      %v1177 = vcvt.s32.f32 %v1168
      %v1178 = vcvt.s32.f32 %v1169
      %v1179 = vcvt.s32.f32 %v1170
      %v1180 = vcvt.s32.f32 %v1171
      %v1181 = vcvt.s32.f32 %v1172
      %v1182 = vcvt.s32.f32 %v1173
      %v1183 = vmul.f32 %v1065, %v1174
      %v1184 = vmul.f32 %v1066, %v1175
      %v1185 = vmul.f32 %v1067, %v1176
      %v1186 = vmul.f32 %v1068, %v1177
      %v1187 = vmul.f32 %v1069, %v1178
      %v1188 = vmul.f32 %v1070, %v1179
      %v1189 = vmul.f32 %v1071, %v1180
      %v1190 = vmul.f32 %v1072, %v1181
      %v1191 = vmul.f32 %v1073, %v1182
      %v1192 = vadd.f32 %v1183, %v1184
      %v1193 = vadd.f32 %v1192, %v1185
      %v1194 = vadd.f32 %v1193, %v1186
      %v1195 = vadd.f32 %v1194, %v1187
      %v1196 = vadd.f32 %v1195, %v1188
      %v1197 = vadd.f32 %v1196, %v1189
      %v1198 = vadd.f32 %v1197, %v1190
      %v1199 = vadd.f32 %v1198, %v1191
      %v1200 = vrot.slane %v1199, 4
      %v1201 = vadd.f32 %v1199, %v1200
      %v1202 = vrot.slane %v1201, 2
      %v1203 = vadd.f32 %v1201, %v1202
      %v1204 = vrot.slane %v1203, 1
      %v1205 = vadd.f32 %v1203, %v1204
      %v1206 = vmul.f32 %v1183, %v1183
      %v1207 = vmul.f32 %v1184, %v1184
      %v1208 = vmul.f32 %v1185, %v1185
      %v1209 = vmul.f32 %v1186, %v1186
      %v1210 = vmul.f32 %v1187, %v1187
      %v1211 = vmul.f32 %v1188, %v1188
      %v1212 = vmul.f32 %v1189, %v1189
      %v1213 = vmul.f32 %v1190, %v1190
      %v1214 = vmul.f32 %v1191, %v1191
      %v1215 = vadd.f32 %v1206, %v1207
      %v1216 = vadd.f32 %v1215, %v1208
      %v1217 = vadd.f32 %v1216, %v1209
      %v1218 = vadd.f32 %v1217, %v1210
      %v1219 = vadd.f32 %v1218, %v1211
      %v1220 = vadd.f32 %v1219, %v1212
      %v1221 = vadd.f32 %v1220, %v1213
      %v1222 = vadd.f32 %v1221, %v1214
      %v1223 = vrot.slane %v1222, 4
      %v1224 = vadd.f32 %v1222, %v1223
      %v1225 = vrot.slane %v1224, 2
      %v1226 = vadd.f32 %v1224, %v1225
      %v1227 = vrot.slane %v1226, 1
      %v1228 = vadd.f32 %v1226, %v1227
      %v1229 = vmul.f32 %v1205, 0.015625
      %v1230 = vmul.f32 %v1228, 0.015625
      %v1231 = vmul.f32 %v1229, %v1229
      %v1232 = vsub.f32 %v1230, %v1231
      %v1233 = vmax.f32 %v1232, 0.0
      %v1234 = vadd.f32 %v1233, 1e-05
      %v1235 = vrsqrt.pop %v1234
      %v1236 = vsub.f32 %v1065, %v1229
      %v1237 = vsub.f32 %v1066, %v1229
      %v1238 = vsub.f32 %v1067, %v1229
      %v1239 = vsub.f32 %v1068, %v1229
      %v1240 = vsub.f32 %v1069, %v1229
      %v1241 = vsub.f32 %v1070, %v1229
      %v1242 = vsub.f32 %v1071, %v1229
      %v1243 = vsub.f32 %v1072, %v1229
      %v1244 = vsub.f32 %v1073, %v1229
      %v1245 = vmul.f32 %v1236, %v1235
      %v1246 = vmul.f32 %v1237, %v1235
      %v1247 = vmul.f32 %v1238, %v1235
      %v1248 = vmul.f32 %v1239, %v1235
      %v1249 = vmul.f32 %v1240, %v1235
      %v1250 = vmul.f32 %v1241, %v1235
      %v1251 = vmul.f32 %v1242, %v1235
      %v1252 = vmul.f32 %v1243, %v1235
      %v1253 = vmul.f32 %v1244, %v1235
      %vm1254 = vcmp.ge.f32.partialorder %v1245, 0.0
      %vm1255 = vcmp.ge.f32.partialorder %v1246, 0.0
      %vm1256 = vcmp.ge.f32.partialorder %v1247, 0.0
      %vm1257 = vcmp.ge.f32.partialorder %v1248, 0.0
      %vm1258 = vcmp.ge.f32.partialorder %v1249, 0.0
      %vm1259 = vcmp.ge.f32.partialorder %v1250, 0.0
      %vm1260 = vcmp.ge.f32.partialorder %v1251, 0.0
      %vm1261 = vcmp.ge.f32.partialorder %v1252, 0.0
      %vm1262 = vcmp.ge.f32.partialorder %v1253, 0.0
      %v1263 = vmul.f32 %v1245, 0.2
      %v1264 = vmul.f32 %v1246, 0.2
      %v1265 = vmul.f32 %v1247, 0.2
      %v1266 = vmul.f32 %v1248, 0.2
      %v1267 = vmul.f32 %v1249, 0.2
      %v1268 = vmul.f32 %v1250, 0.2
      %v1269 = vmul.f32 %v1251, 0.2
      %v1270 = vmul.f32 %v1252, 0.2
      %v1271 = vmul.f32 %v1253, 0.2
      %v1272 = vsel %vm1254, %v1245, %v1263
      %v1273 = vsel %vm1255, %v1246, %v1264
      %v1274 = vsel %vm1256, %v1247, %v1265
      %v1275 = vsel %vm1257, %v1248, %v1266
      %v1276 = vsel %vm1258, %v1249, %v1267
      %v1277 = vsel %vm1259, %v1250, %v1268
      %v1278 = vsel %vm1260, %v1251, %v1269
      %v1279 = vsel %vm1261, %v1252, %v1270
      %v1280 = vsel %vm1262, %v1253, %v1271
      %v1281 = vpack.c.bf16 %v1273, %v1272
      %v1282 = vpack.c.bf16 %v1275, %v1274
      %v1283 = vpack.c.bf16 %v1277, %v1276
      %v1284 = vpack.c.bf16 %v1279, %v1278
      %v1285 = vpack.c.bf16 %v1280, %v1280
      %v1291 = vunpack.c.l.b16 %v1281
      %v1292 = vunpack.c.h.b16 %v1281
      %v1293 = vunpack.c.l.b16 %v1282
      %v1294 = vunpack.c.h.b16 %v1282
      %v1295 = vunpack.c.l.b16 %v1283
      %v1296 = vunpack.c.h.b16 %v1283
      %v1297 = vunpack.c.l.b16 %v1284
      %v1298 = vunpack.c.h.b16 %v1284
      %v1299 = vunpack.c.l.b16 %v1285
      %v1300 = vpack.c.b16 %v1291, %v1291
      %v1301 = vpack.c.b16 %v1292, %v1292
      %v1302 = vpack.c.b16 %v1293, %v1293
      %v1303 = vpack.c.b16 %v1294, %v1294
      %v1304 = vpack.c.b16 %v1295, %v1295
      %v1305 = vpack.c.b16 %v1296, %v1296
      %v1306 = vpack.c.b16 %v1297, %v1297
      %v1307 = vpack.c.b16 %v1298, %v1298
      %v1308 = vpack.c.b16 %v1299, %v1299
      %1318 = vst [vmem:[%s180] sm:$0xf] %v1300
      %1319 = vst [vmem:[%s180 + $0x4] sm:$0xf] %v1301
      %1320 = vst [vmem:[%s180 + $0x8] sm:$0xf] %v1302
      %1321 = vst [vmem:[%s180 + $0xc] sm:$0xf] %v1303
      %1322 = vst [vmem:[%s180 + $0x10] sm:$0xf] %v1304
      %1323 = vst [vmem:[%s180 + $0x14] sm:$0xf] %v1305
      %1324 = vst [vmem:[%s180 + $0x18] sm:$0xf] %v1306
      %1325 = vst [vmem:[%s180 + $0x1c] sm:$0xf] %v1307
      %1326 = vst [vmem:[%s180 + $0x20] sm:$0xf] %v1308
      %p1327 = scmp.lt.s32.totalorder %s18, 1
      %s1328 = scalar_select %p1327, %s18, 1
      %p1329 = scmp.lt.s32.totalorder %s17, 0
      %s1330 = scalar_select %p1329, %s17, 0
      %s1331 = smul.addr %s1328, 9
      %s1332 = sadd.s32 %s1330, %s1331
      %s1333 = smul.addr %s1332, 4
      %s1334 = scalar_lea.vmem %s2, %s1333
      // Predicated region
      $region29: #{unet_down.1} parent=27 // pred_check
        %p1335 = pneg %p97
      $region30: #{unet_down.1} parent=27 // pred_check_branch
        %1337 = sbr.rel (%p1335) target = $region32
      $region31: #{unet_down.1} parent=27 // pred_region
        _
      $region32: #{unet_down.1} parent=27 // pred_fallthru
        _
    $region28: #{unet_down.1} parent=5 // pred_fallthru
      _
    %p1338 = scmp.le.s32.totalorder 2, %s8
    // Predicated region
    $region33: #{unet_down.1} parent=5 // pred_check
      %p1339 = pneg %p1338
    $region34: #{unet_down.1} parent=5 // pred_check_branch
      %1341 = sbr.rel (%p1339) target = $region36
    $region35: #{unet_down.1} parent=5 // pred_region
      %s1342 = ssub.s32 %s8, 2
      // Predicated region
      $region37: #{unet_down.1} parent=35 // pred_check
        %p1343 = pneg %p103
      $region38: #{unet_down.1} parent=35 // pred_check_branch
        %1345 = sbr.rel (%p1343) target = $region40
      $region39: #{unet_down.1} parent=35 // pred_region
        %p1346 = scmp.lt.s32.totalorder %s20, 1
        %s1347 = scalar_select %p1346, %s20, 1
        %p1348 = scmp.lt.s32.totalorder %s19, 0
        %s1349 = scalar_select %p1348, %s19, 0
        %s1350 = smul.addr %s1347, 9
        %s1351 = sadd.s32 %s1349, %s1350
        %s1352 = smul.addr %s1351, 4
        %s1353 = scalar_lea.vmem %s2, %s1352
      $region40: #{unet_down.1} parent=35 // pred_fallthru
        _
    $region36: #{unet_down.1} parent=5 // pred_fallthru
      _
  $region6: #{unet_down.1} parent=0 // loop_footer
    %s12 = sadd.s32 1, %s8
  $region7: #{unet_down.1} parent=0 // loop_footer_branch
    %7 = sbr.rel target = $region3
  $region8: #{unet_down.1} parent=0 // loop_exit
    _

</llo_original>
